<compile_context>
chip_gen: v5e
topology: v5e:2x2
jax: 0.10.0
libtpu: 0.0.40
codegen_flags: <defaults>
</compile_context>

<pallas_src>
import functools

import jax
import jax.numpy as jnp
from jax import lax
from jax.experimental import pallas as pl
from jax.experimental.pallas import tpu as pltpu


def _agg_attn_kernel(x_ref, y_ref, wq_ref, wkv_ref, wp_ref, bp_ref, o_ref,
                     kv_ref, ctx_ref, *, num_heads, head_dim):
    # x_ref: (Tt, C)  y_ref: (N, C)  wq_ref: (C, C)  wkv_ref: (C, 2C)
    # wp_ref: (C, C)  bp_ref: (1, C) f32  o_ref: (Tt, C)
    # kv_ref: (N, 2C) scratch (compute dtype), ctx_ref: (Tt, C) scratch f32
    in_dtype = x_ref.dtype
    C = num_heads * head_dim

    # Cache the fused K/V projection once per batch element; t (program_id(1))
    # is the inner "arbitrary" axis so t == 0 is the first visit for each b.
    @pl.when(pl.program_id(1) == 0)
    def _():
        kv_ref[...] = jnp.dot(
            y_ref[...], wkv_ref[...],
            preferred_element_type=jnp.float32).astype(kv_ref.dtype)

    # Q projection (softmax scale already folded into Wq by the wrapper).
    q = jnp.dot(x_ref[...], wq_ref[...],
                preferred_element_type=jnp.float32).astype(in_dtype)    # (Tt, C)

    # Per-head attention on contiguous lane slices; each head's context is
    # written directly into its slice of the f32 ctx scratch.
    for h in range(num_heads):
        lo, hi = h * head_dim, (h + 1) * head_dim
        qh = q[:, lo:hi]                   # (Tt, Dh)
        kh = kv_ref[:, lo:hi]              # (N, Dh)  ref-slice load (no 2C temp)
        vh = kv_ref[:, C + lo:C + hi]      # (N, Dh)

        # scores = qh @ kh^T, contracting the head dim of both (NT matmul,
        # no materialized transpose).
        s = lax.dot_general(qh, kh, (((1,), (1,)), ((), ())),
                            preferred_element_type=jnp.float32)         # (Tt, N)

        # Numerically stable softmax over keys, in f32.
        s = s - jnp.max(s, axis=-1, keepdims=True)
        p = jnp.exp(s)
        p = p * pl.reciprocal(jnp.sum(p, axis=-1, keepdims=True), approx=True)

        ctx_ref[:, lo:hi] = jnp.dot(p.astype(in_dtype), vh,
                                    preferred_element_type=jnp.float32)  # (Tt, Dh)

    # Output projection (+ bias) with f32 accumulation.
    out = jnp.dot(ctx_ref[...].astype(in_dtype), wp_ref[...],
                  preferred_element_type=jnp.float32)
    out = out + bp_ref[...].astype(jnp.float32)                         # (Tt, C)
    o_ref[...] = out.astype(o_ref.dtype)


def aggregation_attention(x, y, params, *, num_heads, tile_t=None):
    """x: (B, T, C) query source, y: (B, N, C) key/value source."""
    B, T, C = x.shape
    _, N, _ = y.shape
    head_dim = C // num_heads
    scale = head_dim ** (-0.5)
    in_dtype = x.dtype

    # nn.Linear stores weight as (out, in) and computes x @ W.T; pre-transpose
    # to (in, out) so the kernel runs plain x @ W on the MXU. The softmax
    # scale is folded into Wq in f32, then cast to the compute dtype (rounding
    # differs from the reference's post-matmul scale only at dtype eps).
    wq = (params["q_weight"].astype(jnp.float32).T * scale).astype(in_dtype)  # (C, C)
    wkv = params["kv_weight"].T.astype(in_dtype)                              # (C, 2C)
    wp = params["proj_weight"].T.astype(in_dtype)                             # (C, C)
    bp = params["proj_bias"].reshape(1, C).astype(jnp.float32)                # (1, C)

    # Fixed MXU/lane-friendly query tile; ragged tails are masked by Pallas.
    if tile_t is None:
        tile_t = 256 if T >= 256 else (128 if T >= 128 else T)
    grid = (B, pl.cdiv(T, tile_t))
    # TODO(synk): for very long key/value sequences, tile N as a third
    # "arbitrary" grid axis with a flash-style online softmax (m/l/acc
    # scratch) so VMEM is bounded independently of N.

    kernel = functools.partial(_agg_attn_kernel, num_heads=num_heads,
                               head_dim=head_dim)

    def wspec(shape):
        # Constant index_map across the grid -> DMA'd once, never re-fetched.
        # TODO(synk): single-buffer (pipeline_mode=pl.Buffered(1)) once the
        # target jax version is pinned, to halve the weights' VMEM footprint.
        return pl.BlockSpec(shape, lambda b, t: (0,) * len(shape))

    # Explicit VMEM budget (double-buffered blocks + scratch + f32 temps).
    itemsize = jnp.dtype(in_dtype).itemsize
    vmem_need = (
        2 * 2 * tile_t * C * itemsize          # x + out blocks (double-buffered)
        + 2 * N * C * itemsize                 # y block (double-buffered)
        + 2 * (4 * C * C + C) * itemsize       # weights + bias (double-buffered)
        + N * 2 * C * itemsize                 # cached K/V scratch
        + tile_t * C * 4                       # ctx scratch (f32)
        + 2 * tile_t * N * 4                   # score / prob f32 temporaries
    )
    vmem_limit = int(min(128 * 1024 * 1024,
                         max(32 * 1024 * 1024, 2 * vmem_need)))

    grid_spec = pltpu.PrefetchScalarGridSpec(
        num_scalar_prefetch=0,
        grid=grid,
        in_specs=[
            pl.BlockSpec((None, tile_t, C), lambda b, t: (b, t, 0)),   # x
            pl.BlockSpec((None, N, C), lambda b, t: (b, 0, 0)),        # y
            wspec((C, C)),          # Wq (scale folded in)
            wspec((C, 2 * C)),      # Wkv (fused K/V)
            wspec((C, C)),          # Wproj
            wspec((1, C)),          # bproj (f32)
        ],
        out_specs=pl.BlockSpec((None, tile_t, C), lambda b, t: (b, t, 0)),
        scratch_shapes=[
            pltpu.VMEM((N, 2 * C), in_dtype),       # cached K/V projection
            pltpu.VMEM((tile_t, C), jnp.float32),   # per-tile ctx accumulator
        ],
    )

    return pl.pallas_call(
        kernel,
        out_shape=jax.ShapeDtypeStruct((B, T, C), x.dtype),
        grid_spec=grid_spec,
        compiler_params=pltpu.CompilerParams(
            dimension_semantics=("parallel", "arbitrary"),
            vmem_limit_bytes=vmem_limit),
    )(x, y, wq, wkv, wp, bp)


def _reference(x, y, params, *, num_heads):
    """Pure-JAX reference mirroring the PyTorch forward exactly."""
    B, T, C = x.shape
    _, N, _ = y.shape
    head_dim = C // num_heads
    scale = head_dim ** (-0.5)

    q = x @ params["q_weight"].T                              # (B, T, C)
    kv = y @ params["kv_weight"].T                            # (B, N, 2C)
    q = q.reshape(B, T, 1, num_heads, head_dim).transpose(2, 0, 3, 1, 4)[0]
    kv = kv.reshape(B, N, 2, num_heads, head_dim).transpose(2, 0, 3, 1, 4)
    k, v = kv[0], kv[1]                                       # (B, H, N, Dh)
    attn = (q @ k.transpose(0, 1, 3, 2)) * scale              # (B, H, T, N)
    attn = jax.nn.softmax(attn, axis=-1)
    out = (attn @ v).transpose(0, 2, 1, 3).reshape(B, T, C)
    out = out @ params["proj_weight"].T + params["proj_bias"]
    return out


if __name__ == "__main__":
    # Small shapes consistent with the module's forward.
    B, T, N, C = 2, 8, 16, 32
    num_heads = 8

    key = jax.random.PRNGKey(0)
    kx, ky, kq, kkv, kp, kb = jax.random.split(key, 6)

    x = jax.random.normal(kx, (B, T, C), dtype=jnp.float32)
    y = jax.random.normal(ky, (B, N, C), dtype=jnp.float32)

    # Deterministic parameter init (nn.Linear shapes; qkv_bias=False).
    params = {
        "q_weight":    jax.random.normal(kq,  (C, C),     dtype=jnp.float32) * 0.05,
        "kv_weight":   jax.random.normal(kkv, (2 * C, C), dtype=jnp.float32) * 0.05,
        "proj_weight": jax.random.normal(kp,  (C, C),     dtype=jnp.float32) * 0.05,
        "proj_bias":   jax.random.normal(kb,  (C,),       dtype=jnp.float32) * 0.05,
    }

    out = aggregation_attention(x, y, params, num_heads=num_heads)
    out = jax.block_until_ready(out)

    ref = _reference(x, y, params, num_heads=num_heads)
    assert out.shape == (B, T, C)
    # Tolerance relaxed slightly for the approx (EUP) softmax reciprocal.
    assert jnp.allclose(out, ref, atol=2e-3, rtol=2e-3), "mismatch vs reference"

    print("KERNEL_OK")
</pallas_src>

<mosaic_0001>
module attributes {stable_mosaic.version = 11 : i64} {
  func.func @_agg_attn_kernel(%arg0: i32, %arg1: i32, %arg2: memref<1x8x32xf32, #tpu.memory_space<vmem>>, %arg3: memref<1x16x32xf32, #tpu.memory_space<vmem>>, %arg4: memref<32x32xf32, #tpu.memory_space<vmem>>, %arg5: memref<32x64xf32, #tpu.memory_space<vmem>>, %arg6: memref<32x32xf32, #tpu.memory_space<vmem>>, %arg7: memref<1x32xf32, #tpu.memory_space<vmem>>, %arg8: memref<1x8x32xf32, #tpu.memory_space<vmem>>, %arg9: memref<16x64xf32, #tpu.memory_space<vmem>>, %arg10: memref<8x32xf32, #tpu.memory_space<vmem>>) attributes {dimension_semantics = [#tpu.dimension_semantics<parallel>, #tpu.dimension_semantics<arbitrary>], iteration_bounds = array<i64: 2, 1>, scalar_prefetch = 0 : i64, scratch_operands = 2 : i64, tpu.core_type = #tpu.core_type<tc>, window_params = [{transform_indices = @transform_0, window_bounds = array<i64: 1, 8, 32>}, {transform_indices = @transform_1, window_bounds = array<i64: 1, 16, 32>}, {pipeline_mode = #tpu.pipeline_mode<synchronous>, transform_indices = @transform_2, window_bounds = array<i64: 32, 32>}, {pipeline_mode = #tpu.pipeline_mode<synchronous>, transform_indices = @transform_3, window_bounds = array<i64: 32, 64>}, {pipeline_mode = #tpu.pipeline_mode<synchronous>, transform_indices = @transform_4, window_bounds = array<i64: 32, 32>}, {pipeline_mode = #tpu.pipeline_mode<synchronous>, transform_indices = @transform_5, window_bounds = array<i64: 1, 32>}, {transform_indices = @transform_6, window_bounds = array<i64: 1, 8, 32>}]} {
    %c0_i32 = arith.constant 0 : i32
    %0 = arith.cmpi eq, %arg1, %c0_i32 : i32
    %1 = arith.extui %0 : i1 to i32
    %c0_i32_0 = arith.constant 0 : i32
    %2 = arith.cmpi ne, %1, %c0_i32_0 : i32
    scf.if %2 {
      %c0_80 = arith.constant 0 : index
      %c0_81 = arith.constant 0 : index
      %c0_82 = arith.constant 0 : index
      %144 = vector.load %arg3[%c0_80, %c0_81, %c0_82] : memref<1x16x32xf32, #tpu.memory_space<vmem>>, vector<1x16x32xf32>
      %145 = vector.shape_cast %144 : vector<1x16x32xf32> to vector<16x32xf32>
      %c0_83 = arith.constant 0 : index
      %c0_84 = arith.constant 0 : index
      %146 = vector.load %arg5[%c0_83, %c0_84] : memref<32x64xf32, #tpu.memory_space<vmem>>, vector<32x64xf32>
      %cst_85 = arith.constant dense<0.000000e+00> : vector<16x64xf32>
      %147 = tpu.matmul %145, %146, %cst_85 {dimension_numbers = #tpu.dot_dimension_numbers<[1], [0], [0], [1], [0, 0, 1, 1], [], []>} : vector<16x32xf32>, vector<32x64xf32>, vector<16x64xf32> -> vector<16x64xf32>
      %c0_86 = arith.constant 0 : index
      %c0_87 = arith.constant 0 : index
      %148 = vector.load %arg9[%c0_86, %c0_87] : memref<16x64xf32, #tpu.memory_space<vmem>>, vector<16x64xf32>
      tpu.vector_store %arg9[%c0_86, %c0_87], %147 {strides = array<i32>} : memref<16x64xf32, #tpu.memory_space<vmem>>, vector<16x64xf32>,
    } else {
    }
    %c0 = arith.constant 0 : index
    %c0_1 = arith.constant 0 : index
    %c0_2 = arith.constant 0 : index
    %3 = vector.load %arg2[%c0, %c0_1, %c0_2] : memref<1x8x32xf32, #tpu.memory_space<vmem>>, vector<1x8x32xf32>
    %4 = vector.shape_cast %3 : vector<1x8x32xf32> to vector<8x32xf32>
    %c0_3 = arith.constant 0 : index
    %c0_4 = arith.constant 0 : index
    %5 = vector.load %arg4[%c0_3, %c0_4] : memref<32x32xf32, #tpu.memory_space<vmem>>, vector<32x32xf32>
    %cst = arith.constant dense<0.000000e+00> : vector<8x32xf32>
    %6 = tpu.matmul %4, %5, %cst {dimension_numbers = #tpu.dot_dimension_numbers<[1], [0], [0], [1], [0, 0, 1, 1], [], []>} : vector<8x32xf32>, vector<32x32xf32>, vector<8x32xf32> -> vector<8x32xf32>
    %7 = vector.extract_strided_slice %6 {offsets = [0, 0], sizes = [8, 4], strides = [1, 1]} : vector<8x32xf32> to vector<8x4xf32>
    %c0_5 = arith.constant 0 : index
    %c0_6 = arith.constant 0 : index
    %8 = vector.load %arg9[%c0_5, %c0_6] : memref<16x64xf32, #tpu.memory_space<vmem>>, vector<16x4xf32>
    %c0_7 = arith.constant 0 : index
    %c32 = arith.constant 32 : index
    %9 = vector.load %arg9[%c0_7, %c32] : memref<16x64xf32, #tpu.memory_space<vmem>>, vector<16x4xf32>
    %cst_8 = arith.constant dense<0.000000e+00> : vector<8x16xf32>
    %10 = tpu.matmul %7, %8, %cst_8 {dimension_numbers = #tpu.dot_dimension_numbers<[1], [1], [0], [0], [0, 0, 1, 0], [], []>} : vector<8x4xf32>, vector<16x4xf32>, vector<8x16xf32> -> vector<8x16xf32>
    %cst_9 = arith.constant dense<0xFF800000> : vector<8xf32>
    %11 = vector.multi_reduction <maximumf>, %10, %cst_9 [1] : vector<8x16xf32> to vector<8xf32>
    %12 = vector.shape_cast %11 : vector<8xf32> to vector<8x1xf32>
    %13 = vector.broadcast %12 : vector<8x1xf32> to vector<8x16xf32>
    %14 = arith.subf %10, %13 : vector<8x16xf32>
    %15 = math.exp %14 : vector<8x16xf32>
    %cst_10 = arith.constant dense<0.000000e+00> : vector<8xf32>
    %16 = vector.multi_reduction <add>, %15, %cst_10 [1] : vector<8x16xf32> to vector<8xf32>
    %17 = vector.shape_cast %16 : vector<8xf32> to vector<8x1xf32>
    %18 = tpu.reciprocal %17 {approx = true} : vector<8x1xf32> -> vector<8x1xf32>
    %19 = vector.broadcast %18 : vector<8x1xf32> to vector<8x16xf32>
    %20 = arith.mulf %15, %19 : vector<8x16xf32>
    %cst_11 = arith.constant dense<0.000000e+00> : vector<8x4xf32>
    %21 = tpu.matmul %20, %9, %cst_11 {dimension_numbers = #tpu.dot_dimension_numbers<[1], [0], [0], [1], [0, 0, 1, 1], [], []>} : vector<8x16xf32>, vector<16x4xf32>, vector<8x4xf32> -> vector<8x4xf32>
    %c0_12 = arith.constant 0 : index
    %c0_13 = arith.constant 0 : index
    %22 = vector.load %arg10[%c0_12, %c0_13] : memref<8x32xf32, #tpu.memory_space<vmem>>, vector<8x4xf32>
    tpu.vector_store %arg10[%c0_12, %c0_13], %21 {strides = array<i32>} : memref<8x32xf32, #tpu.memory_space<vmem>>, vector<8x4xf32>,
    %23 = vector.extract_strided_slice %6 {offsets = [0, 4], sizes = [8, 4], strides = [1, 1]} : vector<8x32xf32> to vector<8x4xf32>
    %c0_14 = arith.constant 0 : index
    %c4 = arith.constant 4 : index
    %24 = vector.load %arg9[%c0_14, %c4] : memref<16x64xf32, #tpu.memory_space<vmem>>, vector<16x4xf32>
    %c0_15 = arith.constant 0 : index
    %c36 = arith.constant 36 : index
    %25 = vector.load %arg9[%c0_15, %c36] : memref<16x64xf32, #tpu.memory_space<vmem>>, vector<16x4xf32>
    %cst_16 = arith.constant dense<0.000000e+00> : vector<8x16xf32>
    %26 = tpu.matmul %23, %24, %cst_16 {dimension_numbers = #tpu.dot_dimension_numbers<[1], [1], [0], [0], [0, 0, 1, 0], [], []>} : vector<8x4xf32>, vector<16x4xf32>, vector<8x16xf32> -> vector<8x16xf32>
    %cst_17 = arith.constant dense<0xFF800000> : vector<8xf32>
    %27 = vector.multi_reduction <maximumf>, %26, %cst_17 [1] : vector<8x16xf32> to vector<8xf32>
    %28 = vector.shape_cast %27 : vector<8xf32> to vector<8x1xf32>
    %29 = vector.broadcast %28 : vector<8x1xf32> to vector<8x16xf32>
    %30 = arith.subf %26, %29 : vector<8x16xf32>
    %31 = math.exp %30 : vector<8x16xf32>
    %cst_18 = arith.constant dense<0.000000e+00> : vector<8xf32>
    %32 = vector.multi_reduction <add>, %31, %cst_18 [1] : vector<8x16xf32> to vector<8xf32>
    %33 = vector.shape_cast %32 : vector<8xf32> to vector<8x1xf32>
    %34 = tpu.reciprocal %33 {approx = true} : vector<8x1xf32> -> vector<8x1xf32>
    %35 = vector.broadcast %34 : vector<8x1xf32> to vector<8x16xf32>
    %36 = arith.mulf %31, %35 : vector<8x16xf32>
    %cst_19 = arith.constant dense<0.000000e+00> : vector<8x4xf32>
    %37 = tpu.matmul %36, %25, %cst_19 {dimension_numbers = #tpu.dot_dimension_numbers<[1], [0], [0], [1], [0, 0, 1, 1], [], []>} : vector<8x16xf32>, vector<16x4xf32>, vector<8x4xf32> -> vector<8x4xf32>
    %c0_20 = arith.constant 0 : index
    %c4_21 = arith.constant 4 : index
    %38 = vector.load %arg10[%c0_20, %c4_21] : memref<8x32xf32, #tpu.memory_space<vmem>>, vector<8x4xf32>
    tpu.vector_store %arg10[%c0_20, %c4_21], %37 {strides = array<i32>} : memref<8x32xf32, #tpu.memory_space<vmem>>, vector<8x4xf32>,
    %39 = vector.extract_strided_slice %6 {offsets = [0, 8], sizes = [8, 4], strides = [1, 1]} : vector<8x32xf32> to vector<8x4xf32>
    %c0_22 = arith.constant 0 : index
    %c8 = arith.constant 8 : index
    %40 = vector.load %arg9[%c0_22, %c8] : memref<16x64xf32, #tpu.memory_space<vmem>>, vector<16x4xf32>
    %c0_23 = arith.constant 0 : index
    %c40 = arith.constant 40 : index
    %41 = vector.load %arg9[%c0_23, %c40] : memref<16x64xf32, #tpu.memory_space<vmem>>, vector<16x4xf32>
    %cst_24 = arith.constant dense<0.000000e+00> : vector<8x16xf32>
    %42 = tpu.matmul %39, %40, %cst_24 {dimension_numbers = #tpu.dot_dimension_numbers<[1], [1], [0], [0], [0, 0, 1, 0], [], []>} : vector<8x4xf32>, vector<16x4xf32>, vector<8x16xf32> -> vector<8x16xf32>
    %cst_25 = arith.constant dense<0xFF800000> : vector<8xf32>
    %43 = vector.multi_reduction <maximumf>, %42, %cst_25 [1] : vector<8x16xf32> to vector<8xf32>
    %44 = vector.shape_cast %43 : vector<8xf32> to vector<8x1xf32>
    %45 = vector.broadcast %44 : vector<8x1xf32> to vector<8x16xf32>
    %46 = arith.subf %42, %45 : vector<8x16xf32>
    %47 = math.exp %46 : vector<8x16xf32>
    %cst_26 = arith.constant dense<0.000000e+00> : vector<8xf32>
    %48 = vector.multi_reduction <add>, %47, %cst_26 [1] : vector<8x16xf32> to vector<8xf32>
    %49 = vector.shape_cast %48 : vector<8xf32> to vector<8x1xf32>
    %50 = tpu.reciprocal %49 {approx = true} : vector<8x1xf32> -> vector<8x1xf32>
    %51 = vector.broadcast %50 : vector<8x1xf32> to vector<8x16xf32>
    %52 = arith.mulf %47, %51 : vector<8x16xf32>
    %cst_27 = arith.constant dense<0.000000e+00> : vector<8x4xf32>
    %53 = tpu.matmul %52, %41, %cst_27 {dimension_numbers = #tpu.dot_dimension_numbers<[1], [0], [0], [1], [0, 0, 1, 1], [], []>} : vector<8x16xf32>, vector<16x4xf32>, vector<8x4xf32> -> vector<8x4xf32>
    %c0_28 = arith.constant 0 : index
    %c8_29 = arith.constant 8 : index
    %54 = vector.load %arg10[%c0_28, %c8_29] : memref<8x32xf32, #tpu.memory_space<vmem>>, vector<8x4xf32>
    tpu.vector_store %arg10[%c0_28, %c8_29], %53 {strides = array<i32>} : memref<8x32xf32, #tpu.memory_space<vmem>>, vector<8x4xf32>,
    %55 = vector.extract_strided_slice %6 {offsets = [0, 12], sizes = [8, 4], strides = [1, 1]} : vector<8x32xf32> to vector<8x4xf32>
    %c0_30 = arith.constant 0 : index
    %c12 = arith.constant 12 : index
    %56 = vector.load %arg9[%c0_30, %c12] : memref<16x64xf32, #tpu.memory_space<vmem>>, vector<16x4xf32>
    %c0_31 = arith.constant 0 : index
    %c44 = arith.constant 44 : index
    %57 = vector.load %arg9[%c0_31, %c44] : memref<16x64xf32, #tpu.memory_space<vmem>>, vector<16x4xf32>
    %cst_32 = arith.constant dense<0.000000e+00> : vector<8x16xf32>
    %58 = tpu.matmul %55, %56, %cst_32 {dimension_numbers = #tpu.dot_dimension_numbers<[1], [1], [0], [0], [0, 0, 1, 0], [], []>} : vector<8x4xf32>, vector<16x4xf32>, vector<8x16xf32> -> vector<8x16xf32>
    %cst_33 = arith.constant dense<0xFF800000> : vector<8xf32>
    %59 = vector.multi_reduction <maximumf>, %58, %cst_33 [1] : vector<8x16xf32> to vector<8xf32>
    %60 = vector.shape_cast %59 : vector<8xf32> to vector<8x1xf32>
    %61 = vector.broadcast %60 : vector<8x1xf32> to vector<8x16xf32>
    %62 = arith.subf %58, %61 : vector<8x16xf32>
    %63 = math.exp %62 : vector<8x16xf32>
    %cst_34 = arith.constant dense<0.000000e+00> : vector<8xf32>
    %64 = vector.multi_reduction <add>, %63, %cst_34 [1] : vector<8x16xf32> to vector<8xf32>
    %65 = vector.shape_cast %64 : vector<8xf32> to vector<8x1xf32>
    %66 = tpu.reciprocal %65 {approx = true} : vector<8x1xf32> -> vector<8x1xf32>
    %67 = vector.broadcast %66 : vector<8x1xf32> to vector<8x16xf32>
    %68 = arith.mulf %63, %67 : vector<8x16xf32>
    %cst_35 = arith.constant dense<0.000000e+00> : vector<8x4xf32>
    %69 = tpu.matmul %68, %57, %cst_35 {dimension_numbers = #tpu.dot_dimension_numbers<[1], [0], [0], [1], [0, 0, 1, 1], [], []>} : vector<8x16xf32>, vector<16x4xf32>, vector<8x4xf32> -> vector<8x4xf32>
    %c0_36 = arith.constant 0 : index
    %c12_37 = arith.constant 12 : index
    %70 = vector.load %arg10[%c0_36, %c12_37] : memref<8x32xf32, #tpu.memory_space<vmem>>, vector<8x4xf32>
    tpu.vector_store %arg10[%c0_36, %c12_37], %69 {strides = array<i32>} : memref<8x32xf32, #tpu.memory_space<vmem>>, vector<8x4xf32>,
    %71 = vector.extract_strided_slice %6 {offsets = [0, 16], sizes = [8, 4], strides = [1, 1]} : vector<8x32xf32> to vector<8x4xf32>
    %c0_38 = arith.constant 0 : index
    %c16 = arith.constant 16 : index
    %72 = vector.load %arg9[%c0_38, %c16] : memref<16x64xf32, #tpu.memory_space<vmem>>, vector<16x4xf32>
    %c0_39 = arith.constant 0 : index
    %c48 = arith.constant 48 : index
    %73 = vector.load %arg9[%c0_39, %c48] : memref<16x64xf32, #tpu.memory_space<vmem>>, vector<16x4xf32>
    %cst_40 = arith.constant dense<0.000000e+00> : vector<8x16xf32>
    %74 = tpu.matmul %71, %72, %cst_40 {dimension_numbers = #tpu.dot_dimension_numbers<[1], [1], [0], [0], [0, 0, 1, 0], [], []>} : vector<8x4xf32>, vector<16x4xf32>, vector<8x16xf32> -> vector<8x16xf32>
    %cst_41 = arith.constant dense<0xFF800000> : vector<8xf32>
    %75 = vector.multi_reduction <maximumf>, %74, %cst_41 [1] : vector<8x16xf32> to vector<8xf32>
    %76 = vector.shape_cast %75 : vector<8xf32> to vector<8x1xf32>
    %77 = vector.broadcast %76 : vector<8x1xf32> to vector<8x16xf32>
    %78 = arith.subf %74, %77 : vector<8x16xf32>
    %79 = math.exp %78 : vector<8x16xf32>
    %cst_42 = arith.constant dense<0.000000e+00> : vector<8xf32>
    %80 = vector.multi_reduction <add>, %79, %cst_42 [1] : vector<8x16xf32> to vector<8xf32>
    %81 = vector.shape_cast %80 : vector<8xf32> to vector<8x1xf32>
    %82 = tpu.reciprocal %81 {approx = true} : vector<8x1xf32> -> vector<8x1xf32>
    %83 = vector.broadcast %82 : vector<8x1xf32> to vector<8x16xf32>
    %84 = arith.mulf %79, %83 : vector<8x16xf32>
    %cst_43 = arith.constant dense<0.000000e+00> : vector<8x4xf32>
    %85 = tpu.matmul %84, %73, %cst_43 {dimension_numbers = #tpu.dot_dimension_numbers<[1], [0], [0], [1], [0, 0, 1, 1], [], []>} : vector<8x16xf32>, vector<16x4xf32>, vector<8x4xf32> -> vector<8x4xf32>
    %c0_44 = arith.constant 0 : index
    %c16_45 = arith.constant 16 : index
    %86 = vector.load %arg10[%c0_44, %c16_45] : memref<8x32xf32, #tpu.memory_space<vmem>>, vector<8x4xf32>
    tpu.vector_store %arg10[%c0_44, %c16_45], %85 {strides = array<i32>} : memref<8x32xf32, #tpu.memory_space<vmem>>, vector<8x4xf32>,
    %87 = vector.extract_strided_slice %6 {offsets = [0, 20], sizes = [8, 4], strides = [1, 1]} : vector<8x32xf32> to vector<8x4xf32>
    %c0_46 = arith.constant 0 : index
    %c20 = arith.constant 20 : index
    %88 = vector.load %arg9[%c0_46, %c20] : memref<16x64xf32, #tpu.memory_space<vmem>>, vector<16x4xf32>
    %c0_47 = arith.constant 0 : index
    %c52 = arith.constant 52 : index
    %89 = vector.load %arg9[%c0_47, %c52] : memref<16x64xf32, #tpu.memory_space<vmem>>, vector<16x4xf32>
    %cst_48 = arith.constant dense<0.000000e+00> : vector<8x16xf32>
    %90 = tpu.matmul %87, %88, %cst_48 {dimension_numbers = #tpu.dot_dimension_numbers<[1], [1], [0], [0], [0, 0, 1, 0], [], []>} : vector<8x4xf32>, vector<16x4xf32>, vector<8x16xf32> -> vector<8x16xf32>
    %cst_49 = arith.constant dense<0xFF800000> : vector<8xf32>
    %91 = vector.multi_reduction <maximumf>, %90, %cst_49 [1] : vector<8x16xf32> to vector<8xf32>
    %92 = vector.shape_cast %91 : vector<8xf32> to vector<8x1xf32>
    %93 = vector.broadcast %92 : vector<8x1xf32> to vector<8x16xf32>
    %94 = arith.subf %90, %93 : vector<8x16xf32>
    %95 = math.exp %94 : vector<8x16xf32>
    %cst_50 = arith.constant dense<0.000000e+00> : vector<8xf32>
    %96 = vector.multi_reduction <add>, %95, %cst_50 [1] : vector<8x16xf32> to vector<8xf32>
    %97 = vector.shape_cast %96 : vector<8xf32> to vector<8x1xf32>
    %98 = tpu.reciprocal %97 {approx = true} : vector<8x1xf32> -> vector<8x1xf32>
    %99 = vector.broadcast %98 : vector<8x1xf32> to vector<8x16xf32>
    %100 = arith.mulf %95, %99 : vector<8x16xf32>
    %cst_51 = arith.constant dense<0.000000e+00> : vector<8x4xf32>
    %101 = tpu.matmul %100, %89, %cst_51 {dimension_numbers = #tpu.dot_dimension_numbers<[1], [0], [0], [1], [0, 0, 1, 1], [], []>} : vector<8x16xf32>, vector<16x4xf32>, vector<8x4xf32> -> vector<8x4xf32>
    %c0_52 = arith.constant 0 : index
    %c20_53 = arith.constant 20 : index
    %102 = vector.load %arg10[%c0_52, %c20_53] : memref<8x32xf32, #tpu.memory_space<vmem>>, vector<8x4xf32>
    tpu.vector_store %arg10[%c0_52, %c20_53], %101 {strides = array<i32>} : memref<8x32xf32, #tpu.memory_space<vmem>>, vector<8x4xf32>,
    %103 = vector.extract_strided_slice %6 {offsets = [0, 24], sizes = [8, 4], strides = [1, 1]} : vector<8x32xf32> to vector<8x4xf32>
    %c0_54 = arith.constant 0 : index
    %c24 = arith.constant 24 : index
    %104 = vector.load %arg9[%c0_54, %c24] : memref<16x64xf32, #tpu.memory_space<vmem>>, vector<16x4xf32>
    %c0_55 = arith.constant 0 : index
    %c56 = arith.constant 56 : index
    %105 = vector.load %arg9[%c0_55, %c56] : memref<16x64xf32, #tpu.memory_space<vmem>>, vector<16x4xf32>
    %cst_56 = arith.constant dense<0.000000e+00> : vector<8x16xf32>
    %106 = tpu.matmul %103, %104, %cst_56 {dimension_numbers = #tpu.dot_dimension_numbers<[1], [1], [0], [0], [0, 0, 1, 0], [], []>} : vector<8x4xf32>, vector<16x4xf32>, vector<8x16xf32> -> vector<8x16xf32>
    %cst_57 = arith.constant dense<0xFF800000> : vector<8xf32>
    %107 = vector.multi_reduction <maximumf>, %106, %cst_57 [1] : vector<8x16xf32> to vector<8xf32>
    %108 = vector.shape_cast %107 : vector<8xf32> to vector<8x1xf32>
    %109 = vector.broadcast %108 : vector<8x1xf32> to vector<8x16xf32>
    %110 = arith.subf %106, %109 : vector<8x16xf32>
    %111 = math.exp %110 : vector<8x16xf32>
    %cst_58 = arith.constant dense<0.000000e+00> : vector<8xf32>
    %112 = vector.multi_reduction <add>, %111, %cst_58 [1] : vector<8x16xf32> to vector<8xf32>
    %113 = vector.shape_cast %112 : vector<8xf32> to vector<8x1xf32>
    %114 = tpu.reciprocal %113 {approx = true} : vector<8x1xf32> -> vector<8x1xf32>
    %115 = vector.broadcast %114 : vector<8x1xf32> to vector<8x16xf32>
    %116 = arith.mulf %111, %115 : vector<8x16xf32>
    %cst_59 = arith.constant dense<0.000000e+00> : vector<8x4xf32>
    %117 = tpu.matmul %116, %105, %cst_59 {dimension_numbers = #tpu.dot_dimension_numbers<[1], [0], [0], [1], [0, 0, 1, 1], [], []>} : vector<8x16xf32>, vector<16x4xf32>, vector<8x4xf32> -> vector<8x4xf32>
    %c0_60 = arith.constant 0 : index
    %c24_61 = arith.constant 24 : index
    %118 = vector.load %arg10[%c0_60, %c24_61] : memref<8x32xf32, #tpu.memory_space<vmem>>, vector<8x4xf32>
    tpu.vector_store %arg10[%c0_60, %c24_61], %117 {strides = array<i32>} : memref<8x32xf32, #tpu.memory_space<vmem>>, vector<8x4xf32>,
    %119 = vector.extract_strided_slice %6 {offsets = [0, 28], sizes = [8, 4], strides = [1, 1]} : vector<8x32xf32> to vector<8x4xf32>
    %c0_62 = arith.constant 0 : index
    %c28 = arith.constant 28 : index
    %120 = vector.load %arg9[%c0_62, %c28] : memref<16x64xf32, #tpu.memory_space<vmem>>, vector<16x4xf32>
    %c0_63 = arith.constant 0 : index
    %c60 = arith.constant 60 : index
    %121 = vector.load %arg9[%c0_63, %c60] : memref<16x64xf32, #tpu.memory_space<vmem>>, vector<16x4xf32>
    %cst_64 = arith.constant dense<0.000000e+00> : vector<8x16xf32>
    %122 = tpu.matmul %119, %120, %cst_64 {dimension_numbers = #tpu.dot_dimension_numbers<[1], [1], [0], [0], [0, 0, 1, 0], [], []>} : vector<8x4xf32>, vector<16x4xf32>, vector<8x16xf32> -> vector<8x16xf32>
    %cst_65 = arith.constant dense<0xFF800000> : vector<8xf32>
    %123 = vector.multi_reduction <maximumf>, %122, %cst_65 [1] : vector<8x16xf32> to vector<8xf32>
    %124 = vector.shape_cast %123 : vector<8xf32> to vector<8x1xf32>
    %125 = vector.broadcast %124 : vector<8x1xf32> to vector<8x16xf32>
    %126 = arith.subf %122, %125 : vector<8x16xf32>
    %127 = math.exp %126 : vector<8x16xf32>
    %cst_66 = arith.constant dense<0.000000e+00> : vector<8xf32>
    %128 = vector.multi_reduction <add>, %127, %cst_66 [1] : vector<8x16xf32> to vector<8xf32>
    %129 = vector.shape_cast %128 : vector<8xf32> to vector<8x1xf32>
    %130 = tpu.reciprocal %129 {approx = true} : vector<8x1xf32> -> vector<8x1xf32>
    %131 = vector.broadcast %130 : vector<8x1xf32> to vector<8x16xf32>
    %132 = arith.mulf %127, %131 : vector<8x16xf32>
    %cst_67 = arith.constant dense<0.000000e+00> : vector<8x4xf32>
    %133 = tpu.matmul %132, %121, %cst_67 {dimension_numbers = #tpu.dot_dimension_numbers<[1], [0], [0], [1], [0, 0, 1, 1], [], []>} : vector<8x16xf32>, vector<16x4xf32>, vector<8x4xf32> -> vector<8x4xf32>
    %c0_68 = arith.constant 0 : index
    %c28_69 = arith.constant 28 : index
    %134 = vector.load %arg10[%c0_68, %c28_69] : memref<8x32xf32, #tpu.memory_space<vmem>>, vector<8x4xf32>
    tpu.vector_store %arg10[%c0_68, %c28_69], %133 {strides = array<i32>} : memref<8x32xf32, #tpu.memory_space<vmem>>, vector<8x4xf32>,
    %c0_70 = arith.constant 0 : index
    %c0_71 = arith.constant 0 : index
    %135 = vector.load %arg10[%c0_70, %c0_71] : memref<8x32xf32, #tpu.memory_space<vmem>>, vector<8x32xf32>
    %c0_72 = arith.constant 0 : index
    %c0_73 = arith.constant 0 : index
    %136 = vector.load %arg6[%c0_72, %c0_73] : memref<32x32xf32, #tpu.memory_space<vmem>>, vector<32x32xf32>
    %cst_74 = arith.constant dense<0.000000e+00> : vector<8x32xf32>
    %137 = tpu.matmul %135, %136, %cst_74 {dimension_numbers = #tpu.dot_dimension_numbers<[1], [0], [0], [1], [0, 0, 1, 1], [], []>} : vector<8x32xf32>, vector<32x32xf32>, vector<8x32xf32> -> vector<8x32xf32>
    %c0_75 = arith.constant 0 : index
    %c0_76 = arith.constant 0 : index
    %138 = vector.load %arg7[%c0_75, %c0_76] : memref<1x32xf32, #tpu.memory_space<vmem>>, vector<1x32xf32>
    %139 = vector.broadcast %138 : vector<1x32xf32> to vector<8x32xf32>
    %140 = arith.addf %137, %139 : vector<8x32xf32>
    %c0_77 = arith.constant 0 : index
    %c0_78 = arith.constant 0 : index
    %c0_79 = arith.constant 0 : index
    %141 = vector.load %arg8[%c0_77, %c0_78, %c0_79] : memref<1x8x32xf32, #tpu.memory_space<vmem>>, vector<1x8x32xf32>
    %142 = vector.shape_cast %141 : vector<1x8x32xf32> to vector<8x32xf32>
    %143 = vector.shape_cast %140 : vector<8x32xf32> to vector<1x8x32xf32>
    tpu.vector_store %arg8[%c0_77, %c0_78, %c0_79], %143 {strides = array<i32>} : memref<1x8x32xf32, #tpu.memory_space<vmem>>, vector<1x8x32xf32>,
    return
  }
  func.func @transform_0(%arg0: i32, %arg1: i32) -> (i32, i32, i32) {
    %c0_i32 = arith.constant 0 : i32
    %c0_i32_0 = arith.constant 0 : i32
    return %arg0, %arg1, %c0_i32 : i32, i32, i32
  }
  func.func @transform_1(%arg0: i32, %arg1: i32) -> (i32, i32, i32) {
    %c0_i32 = arith.constant 0 : i32
    %c0_i32_0 = arith.constant 0 : i32
    %c0_i32_1 = arith.constant 0 : i32
    return %arg0, %c0_i32, %c0_i32_0 : i32, i32, i32
  }
  func.func @transform_2(%arg0: i32, %arg1: i32) -> (i32, i32) {
    %c0_i32 = arith.constant 0 : i32
    %c0_i32_0 = arith.constant 0 : i32
    %c0_i32_1 = arith.constant 0 : i32
    return %c0_i32, %c0_i32_0 : i32, i32
  }
  func.func @transform_3(%arg0: i32, %arg1: i32) -> (i32, i32) {
    %c0_i32 = arith.constant 0 : i32
    %c0_i32_0 = arith.constant 0 : i32
    %c0_i32_1 = arith.constant 0 : i32
    return %c0_i32, %c0_i32_0 : i32, i32
  }
  func.func @transform_4(%arg0: i32, %arg1: i32) -> (i32, i32) {
    %c0_i32 = arith.constant 0 : i32
    %c0_i32_0 = arith.constant 0 : i32
    %c0_i32_1 = arith.constant 0 : i32
    return %c0_i32, %c0_i32_0 : i32, i32
  }
  func.func @transform_5(%arg0: i32, %arg1: i32) -> (i32, i32) {
    %c0_i32 = arith.constant 0 : i32
    %c0_i32_0 = arith.constant 0 : i32
    %c0_i32_1 = arith.constant 0 : i32
    return %c0_i32, %c0_i32_0 : i32, i32
  }
  func.func @transform_6(%arg0: i32, %arg1: i32) -> (i32, i32, i32) {
    %c0_i32 = arith.constant 0 : i32
    %c0_i32_0 = arith.constant 0 : i32
    return %arg0, %arg1, %c0_i32 : i32, i32, i32
  }
}

</mosaic_0001>

<llo_original>
// kernel: tpu_custom_call.1
$region0: #{tpu_custom_call.1}
  #allocation0 [shape = 'u32[]', space=smem, size = 0x4, offset = 0x4, fixed_abs, tag = 'smem constant byte address 0x4 - core index']
  #allocation1 [shape = 'u32[72,128]{1,0:T(1,128)}', space=vmem, size = 0x9000, scoped, tag = 'internal scratch']
  #allocation2 [shape = 'f32[16,64]{1,0:T(8,128)}', space=vmem, size = 0x2000, scoped, tag = 'scratch operand']
  #allocation3 [shape = 'f32[8,32]{1,0:T(8,128)}', space=vmem, size = 0x1000, scoped, tag = 'scratch operand']
  %s0 = inlined_call_operand.hbm [shape: f32[2,8,32], index: 0, kind: input, shape index: {}]
  %s1 = inlined_call_operand.hbm [shape: f32[2,16,32], index: 1, kind: input, shape index: {}]
  %s2 = inlined_call_operand.hbm [shape: f32[32,32], index: 2, kind: input, shape index: {}]
  %s3 = inlined_call_operand.hbm [shape: f32[32,64], index: 3, kind: input, shape index: {}]
  %s4 = inlined_call_operand.hbm [shape: f32[32,32], index: 4, kind: input, shape index: {}]
  %s5 = inlined_call_operand.vmem [shape: f32[1,32], index: 5, kind: input, shape index: {}]
  %s6 = inlined_call_operand.hbm [shape: f32[2,8,32], index: 6, kind: output, shape index: {}]
  %s7 = sld [smem:[#allocation0]]
  $region81: #{tpu_custom_call.1} parent=0
    _
  %s9 = ssub.s32 1, %s7
  %s10 = scalar_select 0, %s9, %s7
  $region1: #{tpu_custom_call.1} parent=0
    #allocation4 [shape = 'u8[8192]{0}', space=vmem, size = 0x2000, scoped, tag = 'input window, operand 0']
    #allocation5 [shape = 's32[2]{0}', space=sflag, size = 0x8, scoped, tag = 'scoped memory for tpu_custom_call.1']
    #allocation6 [shape = 's32[2]{0}', space=sflag, size = 0x8, scoped, tag = 'scoped memory for tpu_custom_call.1']
    #allocation7 [shape = 'u8[16384]{0}', space=vmem, size = 0x4000, scoped, tag = 'input window, operand 1']
    #allocation8 [shape = 's32[2]{0}', space=sflag, size = 0x8, scoped, tag = 'scoped memory for tpu_custom_call.1']
    #allocation9 [shape = 'u8[16384]{0}', space=vmem, size = 0x4000, scoped, tag = 'input window, operand 2, single buffered']
    #allocation10 [shape = 'u8[16384]{0}', space=vmem, size = 0x4000, scoped, tag = 'input window, operand 3, single buffered']
    #allocation11 [shape = 's32[1]{0}', space=sflag, size = 0x4, scoped, tag = 'scoped memory for tpu_custom_call.1']
    #allocation12 [shape = 'u8[16384]{0}', space=vmem, size = 0x4000, scoped, tag = 'input window, operand 4, single buffered']
    #allocation13 [shape = 'u8[8192]{0}', space=vmem, size = 0x2000, scoped, tag = 'output window, operand 0']
    %11 = vsyncpa [#allocation5], 0
    %s12 = scalar_lea.sflag [#allocation5], 1
    %13 = vsyncpa %s12, 0
    %14 = vsyncpa [#allocation8], 0
    %s15 = scalar_lea.sflag [#allocation8], 1
    %16 = vsyncpa %s15, 0
    %17 = vsyncpa [#allocation11], 0
    %18 = vsyncpa [#allocation6], 0
    %s19 = scalar_lea.sflag [#allocation6], 1
    %20 = vsyncpa %s19, 0
    loop: start=0, step=1, limit=4
    $region2: #{tpu_custom_call.1} parent=1 // loop_pre_header
      _
    $region3: #{tpu_custom_call.1} parent=1 // loop_header
      %s22 = sphi 0, %s26
      %p23 = scmp.ge.s32.totalorder %s22, 4
      %s29 = sphi 0, %s41
      %s30 = sphi 0, %s37
      %s31 = sphi 0, %s29
      %s32 = sphi 0, %s30
      %s33 = sphi 0, %s31
      %s34 = sphi 0, %s32
      %s46 = sphi 0, %s48
      %s49 = sphi 0, %s46
      %s50 = sphi 0, %s49
      %s66 = sphi 0, %s50
      %s72 = sphi 0, %s74
      %s75 = sphi 0, %s72
      %s76 = sphi 0, %s75
      %s92 = sphi 0, %s76
      %s96 = sphi 0, %s96
      %s98 = sphi 0, %s96
      %s99 = sphi 0, %s98
      %s113 = sphi 0, %s99
      %s117 = sphi 0, %s117
      %s119 = sphi 0, %s117
      %s120 = sphi 0, %s119
      %s134 = sphi 0, %s120
      %s138 = sphi 0, %s138
      %s140 = sphi 0, %s138
      %s141 = sphi 0, %s140
      %s155 = sphi 0, %s141
      %s159 = sphi 0, %s159
      %s161 = sphi 0, %s159
      %s162 = sphi 0, %s161
      %s176 = sphi 0, %s162
      %s184 = sphi 0, %s186
      %s187 = sphi 0, %s184
      %s188 = sphi 0, %s187
      %s204 = sphi 0, %s188
    $region4: #{tpu_custom_call.1} parent=1 // loop_header_branch
      %25 = sbr.rel (%p23) target = $region8
    $region5: #{tpu_custom_call.1} parent=1 // loop_body
      %s27 = ssub.s32 %s22, 1
      %s28 = ssub.s32 %s22, 2
      %s35 = sadd.s32 1, %s30
      %p36 = scmp.ge.s32.totalorder %s35, 1
      %s37 = scalar_select %p36, 0, %s35
      %s38 = sadd.s32 1, %s29
      %s39 = scalar_select %p36, %s38, %s29
      %p40 = scmp.ge.s32.totalorder %s39, 2
      %s41 = scalar_select %p40, 0, %s39
      %s42 = ssub.s32 %s29, %s41
      %s43 = ssub.s32 %s30, %s37
      %s44 = sor.u32 %s42, %s43
      %p45 = scmp.eq.s32.totalorder %s44, 0
      %s47 = sadd.s32 %s46, 1
      %s48 = scalar_select %p45, %s46, %s47
      %p51 = pneg %p45
      %p52 = scmp.eq.s32.totalorder %s22, 1
      %p53 = por %p51, %p52
      %p54 = scmp.ne.s32.totalorder %s46, %s49
      %p55 = scmp.eq.s32.totalorder %s22, 0
      %p56 = por %p54, %p55
      %p57 = scmp.ne.s32.totalorder %s46, %s49
      %p58 = scmp.eq.s32.totalorder %s27, 1
      %p59 = por %p57, %p58
      %p60 = scmp.ne.s32.totalorder %s49, %s50
      %p61 = scmp.eq.s32.totalorder %s27, 0
      %p62 = por %p60, %p61
      %p63 = scmp.ne.s32.totalorder %s49, %s50
      %p64 = scmp.eq.s32.totalorder %s28, 1
      %p65 = por %p63, %p64
      %p67 = scmp.ne.s32.totalorder %s50, %s66
      %p68 = scmp.eq.s32.totalorder %s28, 0
      %p69 = por %p67, %p68
      %s70 = ssub.s32 %s29, %s41
      %p71 = scmp.eq.s32.totalorder %s70, 0
      %s73 = sadd.s32 %s72, 1
      %s74 = scalar_select %p71, %s72, %s73
      %p77 = pneg %p71
      %p78 = scmp.eq.s32.totalorder %s22, 1
      %p79 = por %p77, %p78
      %p80 = scmp.ne.s32.totalorder %s72, %s75
      %p81 = scmp.eq.s32.totalorder %s22, 0
      %p82 = por %p80, %p81
      %p83 = scmp.ne.s32.totalorder %s72, %s75
      %p84 = scmp.eq.s32.totalorder %s27, 1
      %p85 = por %p83, %p84
      %p86 = scmp.ne.s32.totalorder %s75, %s76
      %p87 = scmp.eq.s32.totalorder %s27, 0
      %p88 = por %p86, %p87
      %p89 = scmp.ne.s32.totalorder %s75, %s76
      %p90 = scmp.eq.s32.totalorder %s28, 1
      %p91 = por %p89, %p90
      %p93 = scmp.ne.s32.totalorder %s76, %s92
      %p94 = scmp.eq.s32.totalorder %s28, 0
      %p95 = por %p93, %p94
      %s97 = sadd.s32 %s96, 1
      %p100 = scmp.eq.s32.totalorder %s22, 1
      %p101 = scmp.ne.s32.totalorder %s96, %s98
      %p102 = scmp.eq.s32.totalorder %s22, 0
      %p103 = por %p101, %p102
      %p104 = scmp.ne.s32.totalorder %s96, %s98
      %p105 = scmp.eq.s32.totalorder %s27, 1
      %p106 = por %p104, %p105
      %p107 = scmp.ne.s32.totalorder %s98, %s99
      %p108 = scmp.eq.s32.totalorder %s27, 0
      %p109 = por %p107, %p108
      %p110 = scmp.ne.s32.totalorder %s98, %s99
      %p111 = scmp.eq.s32.totalorder %s28, 1
      %p112 = por %p110, %p111
      %p114 = scmp.ne.s32.totalorder %s99, %s113
      %p115 = scmp.eq.s32.totalorder %s28, 0
      %p116 = por %p114, %p115
      %s118 = sadd.s32 %s117, 1
      %p121 = scmp.eq.s32.totalorder %s22, 1
      %p122 = scmp.ne.s32.totalorder %s117, %s119
      %p123 = scmp.eq.s32.totalorder %s22, 0
      %p124 = por %p122, %p123
      %p125 = scmp.ne.s32.totalorder %s117, %s119
      %p126 = scmp.eq.s32.totalorder %s27, 1
      %p127 = por %p125, %p126
      %p128 = scmp.ne.s32.totalorder %s119, %s120
      %p129 = scmp.eq.s32.totalorder %s27, 0
      %p130 = por %p128, %p129
      %p131 = scmp.ne.s32.totalorder %s119, %s120
      %p132 = scmp.eq.s32.totalorder %s28, 1
      %p133 = por %p131, %p132
      %p135 = scmp.ne.s32.totalorder %s120, %s134
      %p136 = scmp.eq.s32.totalorder %s28, 0
      %p137 = por %p135, %p136
      %s139 = sadd.s32 %s138, 1
      %p142 = scmp.eq.s32.totalorder %s22, 1
      %p143 = scmp.ne.s32.totalorder %s138, %s140
      %p144 = scmp.eq.s32.totalorder %s22, 0
      %p145 = por %p143, %p144
      %p146 = scmp.ne.s32.totalorder %s138, %s140
      %p147 = scmp.eq.s32.totalorder %s27, 1
      %p148 = por %p146, %p147
      %p149 = scmp.ne.s32.totalorder %s140, %s141
      %p150 = scmp.eq.s32.totalorder %s27, 0
      %p151 = por %p149, %p150
      %p152 = scmp.ne.s32.totalorder %s140, %s141
      %p153 = scmp.eq.s32.totalorder %s28, 1
      %p154 = por %p152, %p153
      %p156 = scmp.ne.s32.totalorder %s141, %s155
      %p157 = scmp.eq.s32.totalorder %s28, 0
      %p158 = por %p156, %p157
      %s160 = sadd.s32 %s159, 1
      %p163 = scmp.eq.s32.totalorder %s22, 1
      %p164 = scmp.ne.s32.totalorder %s159, %s161
      %p165 = scmp.eq.s32.totalorder %s22, 0
      %p166 = por %p164, %p165
      %p167 = scmp.ne.s32.totalorder %s159, %s161
      %p168 = scmp.eq.s32.totalorder %s27, 1
      %p169 = por %p167, %p168
      %p170 = scmp.ne.s32.totalorder %s161, %s162
      %p171 = scmp.eq.s32.totalorder %s27, 0
      %p172 = por %p170, %p171
      %p173 = scmp.ne.s32.totalorder %s161, %s162
      %p174 = scmp.eq.s32.totalorder %s28, 1
      %p175 = por %p173, %p174
      %p177 = scmp.ne.s32.totalorder %s162, %s176
      %p178 = scmp.eq.s32.totalorder %s28, 0
      %p179 = por %p177, %p178
      %s180 = ssub.s32 %s29, %s41
      %s181 = ssub.s32 %s30, %s37
      %s182 = sor.u32 %s180, %s181
      %p183 = scmp.eq.s32.totalorder %s182, 0
      %s185 = sadd.s32 %s184, 1
      %s186 = scalar_select %p183, %s184, %s185
      %p189 = pneg %p183
      %p190 = scmp.eq.s32.totalorder %s22, 1
      %p191 = por %p189, %p190
      %p192 = scmp.ne.s32.totalorder %s184, %s187
      %p193 = scmp.eq.s32.totalorder %s22, 0
      %p194 = por %p192, %p193
      %p195 = scmp.ne.s32.totalorder %s184, %s187
      %p196 = scmp.eq.s32.totalorder %s27, 1
      %p197 = por %p195, %p196
      %p198 = scmp.ne.s32.totalorder %s187, %s188
      %p199 = scmp.eq.s32.totalorder %s27, 0
      %p200 = por %p198, %p199
      %p201 = scmp.ne.s32.totalorder %s187, %s188
      %p202 = scmp.eq.s32.totalorder %s28, 1
      %p203 = por %p201, %p202
      %p205 = scmp.ne.s32.totalorder %s188, %s204
      %p206 = scmp.eq.s32.totalorder %s28, 0
      %p207 = por %p205, %p206
      %p208 = scmp.le.s32.totalorder 1, %s22
      %p209 = scmp.lt.s32.totalorder %s22, 3
      %p210 = pnand %p208, %p209
      %p211 = pneg %p210
      // Predicated region
      $region9: #{tpu_custom_call.1} parent=5 // pred_check
        _
      $region10: #{tpu_custom_call.1} parent=5 // pred_check_branch
        %213 = sbr.rel (%p210) target = $region12
      $region11: #{tpu_custom_call.1} parent=5 // pred_region
        %s214 = ssub.s32 %s22, 1
        // Predicated region
        $region13: #{tpu_custom_call.1} parent=11 // pred_check
          %p215 = pneg %p109
        $region14: #{tpu_custom_call.1} parent=11 // pred_check_branch
          %217 = sbr.rel (%p215) target = $region16
        $region15: #{tpu_custom_call.1} parent=11 // pred_region
          %219 = vsyncadd [#allocation8], 0
          %s220 = sshll.u32 %s2, 4
          %s221 = int_to_ptr.hbm [resolvable:$true] %s220
          %s222 = sshll.u32 [#allocation9], 4
          %s223 = int_to_ptr.vmem [resolvable:$true] %s222
          %228 = dma.hbm_to_vmem [thread:$0]  %s221, 512, %s223, [#allocation8], 128, 128, 8
        $region16: #{tpu_custom_call.1} parent=11 // pred_fallthru
          _
        // Predicated region
        $region17: #{tpu_custom_call.1} parent=11 // pred_check
          %p229 = pneg %p130
        $region18: #{tpu_custom_call.1} parent=11 // pred_check_branch
          %231 = sbr.rel (%p229) target = $region20
        $region19: #{tpu_custom_call.1} parent=11 // pred_region
          %233 = vsyncadd [#allocation11], 0
          %s234 = sshll.u32 %s3, 4
          %s235 = int_to_ptr.hbm [resolvable:$true] %s234
          %s236 = sshll.u32 [#allocation10], 4
          %s237 = int_to_ptr.vmem [resolvable:$true] %s236
          %242 = dma.hbm_to_vmem [thread:$0]  %s235, 512, %s237, [#allocation11], 128, 128, 8
        $region20: #{tpu_custom_call.1} parent=11 // pred_fallthru
          _
        // Predicated region
        $region21: #{tpu_custom_call.1} parent=11 // pred_check
          %p243 = pneg %p151
        $region22: #{tpu_custom_call.1} parent=11 // pred_check_branch
          %245 = sbr.rel (%p243) target = $region24
        $region23: #{tpu_custom_call.1} parent=11 // pred_region
          %247 = vsyncadd [#allocation11], 0
          %s248 = sshll.u32 %s4, 4
          %s249 = int_to_ptr.hbm [resolvable:$true] %s248
          %s250 = sshll.u32 [#allocation12], 4
          %s251 = int_to_ptr.vmem [resolvable:$true] %s250
          %256 = dma.hbm_to_vmem [thread:$0]  %s249, 512, %s251, [#allocation11], 128, 128, 8
        $region24: #{tpu_custom_call.1} parent=11 // pred_fallthru
          _
        // Predicated region
        $region25: #{tpu_custom_call.1} parent=11 // pred_check
          %p257 = pneg %p172
        $region26: #{tpu_custom_call.1} parent=11 // pred_check_branch
          %259 = sbr.rel (%p257) target = $region28
        $region27: #{tpu_custom_call.1} parent=11 // pred_region
          _
        $region28: #{tpu_custom_call.1} parent=11 // pred_fallthru
          _
      $region12: #{tpu_custom_call.1} parent=5 // pred_fallthru
        _
      %p260 = scmp.lt.s32.totalorder %s22, 2
      // Predicated region
      $region29: #{tpu_custom_call.1} parent=5 // pred_check
        %p261 = pneg %p260
      $region30: #{tpu_custom_call.1} parent=5 // pred_check_branch
        %263 = sbr.rel (%p261) target = $region32
      $region31: #{tpu_custom_call.1} parent=5 // pred_region
        // Predicated region
        $region33: #{tpu_custom_call.1} parent=31 // pred_check
          %p264 = pneg %p56
        $region34: #{tpu_custom_call.1} parent=31 // pred_check_branch
          %266 = sbr.rel (%p264) target = $region36
        $region35: #{tpu_custom_call.1} parent=31 // pred_region
          %s267 = sand.u32 %s46, 1
          %s268 = scalar_lea.sflag [#allocation5], %s267
          %s269 = sand.u32 %s46, 1
          %s270 = smul.addr %s269, 8
          %s271 = scalar_lea.vmem [#allocation4], %s270
          %273 = vsyncadd %s268, 0
          %s274 = sadd.s32 %s30, %s29
          %s275 = smul.addr %s274, 8
          %s276 = scalar_lea.hbm %s0, %s275
          %s278 = sshll.u32 %s276, 4
          %s279 = int_to_ptr.hbm [resolvable:$true] %s278
          %s280 = sshll.u32 %s271, 4
          %s281 = int_to_ptr.vmem [resolvable:$true] %s280
          %283 = dma.hbm_to_vmem [thread:$0]  %s279, 128, %s281, %s268
        $region36: #{tpu_custom_call.1} parent=31 // pred_fallthru
          _
        // Predicated region
        $region37: #{tpu_custom_call.1} parent=31 // pred_check
          %p284 = pneg %p82
        $region38: #{tpu_custom_call.1} parent=31 // pred_check_branch
          %286 = sbr.rel (%p284) target = $region40
        $region39: #{tpu_custom_call.1} parent=31 // pred_region
          %s287 = sand.u32 %s22, 1
          %s288 = scalar_lea.sflag [#allocation8], %s287
          %s289 = sand.u32 %s72, 1
          %s290 = smul.addr %s289, 16
          %s291 = scalar_lea.vmem [#allocation7], %s290
          %293 = vsyncadd %s288, 0
          %s294 = smul.addr %s29, 2
          %s295 = smul.addr %s294, 8
          %s296 = scalar_lea.hbm %s1, %s295
          %s297 = sshll.u32 %s296, 4
          %s298 = int_to_ptr.hbm [resolvable:$true] %s297
          %s299 = sshll.u32 %s291, 4
          %s300 = int_to_ptr.vmem [resolvable:$true] %s299
          %305 = dma.hbm_to_vmem [thread:$0]  %s298, 256, %s300, %s288, 128, 128, 8
        $region40: #{tpu_custom_call.1} parent=31 // pred_fallthru
          _
      $region32: #{tpu_custom_call.1} parent=5 // pred_fallthru
        _
      %p306 = scmp.le.s32.totalorder 1, %s22
      %p307 = scmp.lt.s32.totalorder %s22, 3
      %p308 = pnand %p306, %p307
      %p309 = pneg %p308
      // Predicated region
      $region41: #{tpu_custom_call.1} parent=5 // pred_check
        _
      $region42: #{tpu_custom_call.1} parent=5 // pred_check_branch
        %311 = sbr.rel (%p308) target = $region44
      $region43: #{tpu_custom_call.1} parent=5 // pred_region
        %s312 = ssub.s32 %s22, 1
        %s313 = sand.u32 %s49, 1
        %s314 = scalar_lea.sflag [#allocation5], %s313
        %s315 = sand.u32 %s49, 1
        %s316 = smul.addr %s315, 8
        %s317 = scalar_lea.vmem [#allocation4], %s316
        // Predicated region
        $region45: #{tpu_custom_call.1} parent=43 // pred_check
          %p318 = pneg %p62
        $region46: #{tpu_custom_call.1} parent=43 // pred_check_branch
          %320 = sbr.rel (%p318) target = $region48
        $region47: #{tpu_custom_call.1} parent=43 // pred_region
          %322 = dma.done %s314, 128
        $region48: #{tpu_custom_call.1} parent=43 // pred_fallthru
          _
        %s323 = sand.u32 %s27, 1
        %s324 = scalar_lea.sflag [#allocation8], %s323
        %s325 = sand.u32 %s75, 1
        %s326 = smul.addr %s325, 16
        %s327 = scalar_lea.vmem [#allocation7], %s326
        // Predicated region
        $region49: #{tpu_custom_call.1} parent=43 // pred_check
          %p328 = pneg %p88
        $region50: #{tpu_custom_call.1} parent=43 // pred_check_branch
          %330 = sbr.rel (%p328) target = $region52
        $region51: #{tpu_custom_call.1} parent=43 // pred_region
          %332 = dma.done %s324, 256
        $region52: #{tpu_custom_call.1} parent=43 // pred_fallthru
          _
        // Predicated region
        $region53: #{tpu_custom_call.1} parent=43 // pred_check
          %p333 = pneg %p109
        $region54: #{tpu_custom_call.1} parent=43 // pred_check_branch
          %335 = sbr.rel (%p333) target = $region56
        $region55: #{tpu_custom_call.1} parent=43 // pred_region
          %337 = dma.done [#allocation8], 512
        $region56: #{tpu_custom_call.1} parent=43 // pred_fallthru
          _
        // Predicated region
        $region57: #{tpu_custom_call.1} parent=43 // pred_check
          %p338 = pneg %p130
        $region58: #{tpu_custom_call.1} parent=43 // pred_check_branch
          %340 = sbr.rel (%p338) target = $region60
        $region59: #{tpu_custom_call.1} parent=43 // pred_region
          %342 = dma.done [#allocation11], 512
        $region60: #{tpu_custom_call.1} parent=43 // pred_fallthru
          _
        // Predicated region
        $region61: #{tpu_custom_call.1} parent=43 // pred_check
          %p343 = pneg %p151
        $region62: #{tpu_custom_call.1} parent=43 // pred_check_branch
          %345 = sbr.rel (%p343) target = $region64
        $region63: #{tpu_custom_call.1} parent=43 // pred_region
          %347 = dma.done [#allocation11], 512
        $region64: #{tpu_custom_call.1} parent=43 // pred_fallthru
          _
        %s348 = sand.u32 %s49, 1
        %s349 = scalar_lea.sflag [#allocation5], %s348
        %s350 = sand.u32 %s49, 1
        %s351 = smul.addr %s350, 8
        %s352 = scalar_lea.vmem [#allocation4], %s351
        %p353 = pneg %p62
        %p354 = pneg %p59
        %s355 = sand.u32 %s27, 1
        %s356 = scalar_lea.sflag [#allocation8], %s355
        %s357 = sand.u32 %s75, 1
        %s358 = smul.addr %s357, 16
        %s359 = scalar_lea.vmem [#allocation7], %s358
        %p360 = pneg %p88
        %p361 = pneg %p85
        %p362 = pneg %p109
        %p363 = pneg %p106
        %p364 = pneg %p130
        %p365 = pneg %p127
        %p366 = pneg %p151
        %p367 = pneg %p148
        %p368 = pneg %p172
        %p369 = pneg %p169
        %p370 = pneg %p200
        %p371 = pneg %p197
        %s372 = sand.u32 %s187, 1
        %s373 = scalar_lea.sflag [#allocation6], %s372
        %s374 = sand.u32 %s187, 1
        %s375 = smul.addr %s374, 8
        %s376 = scalar_lea.vmem [#allocation13], %s375
        %p377 = scmp.eq.s32.totalorder %s32, 0
        // Predicated region
        $region65: #{tpu_custom_call.1} parent=43 // pred_check
          %p378 = pneg %p377
        $region66: #{tpu_custom_call.1} parent=43 // pred_check_branch
          %380 = sbr.rel (%p378) target = $region68
        $region67: #{tpu_custom_call.1} parent=43 // pred_region
          %v381 = vld [vmem:[%s327] sm:$0xff]
          %v382 = vld [vmem:[%s327 + $0x8] sm:$0xff]
          %v383 = vld [vmem:[#allocation10] sm:$0xff]
          %v384 = vld [vmem:[#allocation10 + $0x8] sm:$0xff]
          %v385 = vld [vmem:[#allocation10 + $0x10] sm:$0xff]
          %v386 = vld [vmem:[#allocation10 + $0x18] sm:$0xff]
          %vm387 = vcmask 261120
          %v389 = vsel %vm387, %v381, 0
          %v392 = vsel %vm387, %v382, 0
          %394 = vmatpush.msra.mxu0 0.0
          %395 = vmatpush.msra.mxu0 0.0
          %396 = vmatpush.msra.mxu0 0.0
          %397 = vmatpush.msra.mxu0 0.0
          %398 = vmatpush.msra.mxu0 0.0
          %399 = vmatpush.msra.mxu0 0.0
          %400 = vmatpush.msra.mxu0 0.0
          %401 = vmatpush.msra.mxu0 0.0
          %402 = vmatpush.msra.mxu0 0.0
          %403 = vmatpush.msra.mxu0 0.0
          %404 = vmatpush.msra.mxu0 0.0
          %405 = vmatpush.msra.mxu0 0.0
          %406 = vmatpush.msra.mxu0 %v386
          %407 = vmatpush.msra.mxu0 %v385
          %408 = vmatpush.msra.mxu0 %v384
          %409 = vmatpush.msra.mxu0 %v383
          %410 = vmatmul.f32.gmra.mxu0 %v389
          %v411 = vpop.f32.mrf.mxu0
          %v412 = vadd.f32 0.0, %v411
          %413 = vmatmul.f32.gmra.mxu0 %v392
          %v414 = vpop.f32.mrf.mxu0
          %v415 = vadd.f32 0.0, %v414
          %416 = vdwg.mxu0
          %vm417 = vcmask 523264
          %418 = vst.msk [vmem:[#allocation2] sm:$0xff] %vm417, %v412
          %419 = vst.msk [vmem:[#allocation2 + $0x8] sm:$0xff] %vm417, %v415
        $region68: #{tpu_custom_call.1} parent=43 // pred_fallthru
          _
        %v420 = vld [vmem:[%s317] sm:$0xff]
        %v421 = vld [vmem:[#allocation9] sm:$0xff]
        %v422 = vld [vmem:[#allocation9 + $0x8] sm:$0xff]
        %v423 = vld [vmem:[#allocation9 + $0x10] sm:$0xff]
        %v424 = vld [vmem:[#allocation9 + $0x18] sm:$0xff]
        %vm425 = vcmask 261120
        %v427 = vsel %vm425, %v420, 0
        %429 = vmatpush.msra.mxu0 0.0
        %430 = vmatpush.msra.mxu0 0.0
        %431 = vmatpush.msra.mxu0 0.0
        %432 = vmatpush.msra.mxu0 0.0
        %433 = vmatpush.msra.mxu0 0.0
        %434 = vmatpush.msra.mxu0 0.0
        %435 = vmatpush.msra.mxu0 0.0
        %436 = vmatpush.msra.mxu0 0.0
        %437 = vmatpush.msra.mxu0 0.0
        %438 = vmatpush.msra.mxu0 0.0
        %439 = vmatpush.msra.mxu0 0.0
        %440 = vmatpush.msra.mxu0 0.0
        %441 = vmatpush.msra.mxu0 %v424
        %442 = vmatpush.msra.mxu0 %v423
        %443 = vmatpush.msra.mxu0 %v422
        %444 = vmatpush.msra.mxu0 %v421
        %445 = vmatmul.f32.gmra.mxu0 %v427
        %v446 = vpop.f32.mrf.mxu0
        %v447 = vadd.f32 0.0, %v446
        %448 = vdwg.mxu0
        %v449 = vld [vmem:[#allocation2] sm:$0xff]
        %v450 = vld [vmem:[#allocation2 + $0x8] sm:$0xff]
        %vm451 = vcmask 31744
        %v453 = vsel %vm451, %v447, 0
        %v456 = vsel %vm451, %v449, 0
        %v459 = vsel %vm451, %v450, 0
        %461 = vmatpush.xpose.msra.mxu0 0.0
        %462 = vmatpush.xpose.msra.mxu0 0.0
        %463 = vmatpush.xpose.msra.mxu0 0.0
        %464 = vmatpush.xpose.msra.mxu0 0.0
        %465 = vmatpush.xpose.msra.mxu0 0.0
        %466 = vmatpush.xpose.msra.mxu0 0.0
        %467 = vmatpush.xpose.msra.mxu0 0.0
        %468 = vmatpush.xpose.msra.mxu0 0.0
        %469 = vmatpush.xpose.msra.mxu0 0.0
        %470 = vmatpush.xpose.msra.mxu0 0.0
        %471 = vmatpush.xpose.msra.mxu0 0.0
        %472 = vmatpush.xpose.msra.mxu0 0.0
        %473 = vmatpush.xpose.msra.mxu0 0.0
        %474 = vmatpush.xpose.msra.mxu0 0.0
        %475 = vmatpush.xpose.msra.mxu0 %v459
        %476 = vmatpush.xpose.msra.mxu0 %v456
        %477 = vmatmul.f32.gmra.mxu0 %v453
        %v478 = vpop.f32.mrf.mxu0
        %v479 = vadd.f32 0.0, %v478
        %480 = vdwg.mxu0
        %vm481 = vcmask 130048
        %v482 = vsel %vm481, %v479, -inf
        %483 = vmax.xlane.f32.xlu0 %v482
        %v484 = vpop.xlane.xlu0 %483
        %v485 = vsub.f32 %v479, %v484
        %v486 = vmul.f32 %v485, 1.442695
        %v487 = vpow.pop %v486
        %v488 = vsel %vm481, %v487, 0.0
        %489 = vadd.xlane.f32.xlu0 %v488
        %v490 = vpop.xlane.xlu0 %489
        %v491 = vrcp.pop %v490
        %v492 = vmul.f32 %v487, %v491
        %493 = vrot.lane.b32.xlu0 %v449, 96
        %v494 = vpop.permute.xlu0 %493
        %495 = vrot.lane.b32.xlu0 %v450, 96
        %v496 = vpop.permute.xlu0 %495
        %v500 = vsel %vm481, %v492, 0
        %502 = vmatpush.msra.mxu0 0.0
        %503 = vmatpush.msra.mxu0 0.0
        %504 = vmatpush.msra.mxu0 0.0
        %505 = vmatpush.msra.mxu0 0.0
        %506 = vmatpush.msra.mxu0 0.0
        %507 = vmatpush.msra.mxu0 0.0
        %508 = vmatpush.msra.mxu0 0.0
        %509 = vmatpush.msra.mxu0 0.0
        %510 = vmatpush.msra.mxu0 0.0
        %511 = vmatpush.msra.mxu0 0.0
        %512 = vmatpush.msra.mxu0 0.0
        %513 = vmatpush.msra.mxu0 0.0
        %514 = vmatpush.msra.mxu0 0.0
        %515 = vmatpush.msra.mxu0 0.0
        %516 = vmatpush.msra.mxu0 %v496
        %517 = vmatpush.msra.mxu0 %v494
        %518 = vmatmul.f32.gmra.mxu0 %v500
        %v519 = vpop.f32.mrf.mxu0
        %v520 = vadd.f32 0.0, %v519
        %521 = vdwg.mxu0
        %522 = vst.msk [vmem:[#allocation3] sm:$0xff] %vm451, %v520
        %v523 = vld [vmem:[#allocation2] sm:$0xff]
        %v524 = vld [vmem:[#allocation2 + $0x8] sm:$0xff]
        %525 = vrot.lane.b32.xlu0 %v447, 124
        %v526 = vpop.permute.xlu0 %525
        %529 = vrot.lane.b32.xlu0 %v523, 124
        %v530 = vpop.permute.xlu0 %529
        %531 = vrot.lane.b32.xlu0 %v524, 124
        %v532 = vpop.permute.xlu0 %531
        %v533 = vsel %vm451, %v526, 0
        %v535 = vsel %vm451, %v530, 0
        %v537 = vsel %vm451, %v532, 0
        %539 = vmatpush.xpose.msra.mxu0 0.0
        %540 = vmatpush.xpose.msra.mxu0 0.0
        %541 = vmatpush.xpose.msra.mxu0 0.0
        %542 = vmatpush.xpose.msra.mxu0 0.0
        %543 = vmatpush.xpose.msra.mxu0 0.0
        %544 = vmatpush.xpose.msra.mxu0 0.0
        %545 = vmatpush.xpose.msra.mxu0 0.0
        %546 = vmatpush.xpose.msra.mxu0 0.0
        %547 = vmatpush.xpose.msra.mxu0 0.0
        %548 = vmatpush.xpose.msra.mxu0 0.0
        %549 = vmatpush.xpose.msra.mxu0 0.0
        %550 = vmatpush.xpose.msra.mxu0 0.0
        %551 = vmatpush.xpose.msra.mxu0 0.0
        %552 = vmatpush.xpose.msra.mxu0 0.0
        %553 = vmatpush.xpose.msra.mxu0 %v537
        %554 = vmatpush.xpose.msra.mxu0 %v535
        %555 = vmatmul.f32.gmra.mxu0 %v533
        %v556 = vpop.f32.mrf.mxu0
        %v557 = vadd.f32 0.0, %v556
        %558 = vdwg.mxu0
        %v559 = vsel %vm481, %v557, -inf
        %560 = vmax.xlane.f32.xlu0 %v559
        %v561 = vpop.xlane.xlu0 %560
        %v562 = vsub.f32 %v557, %v561
        %v563 = vmul.f32 %v562, 1.442695
        %v564 = vpow.pop %v563
        %v565 = vsel %vm481, %v564, 0.0
        %566 = vadd.xlane.f32.xlu0 %v565
        %v567 = vpop.xlane.xlu0 %566
        %v568 = vrcp.pop %v567
        %v569 = vmul.f32 %v564, %v568
        %570 = vrot.lane.b32.xlu0 %v523, 92
        %v571 = vpop.permute.xlu0 %570
        %572 = vrot.lane.b32.xlu0 %v524, 92
        %v573 = vpop.permute.xlu0 %572
        %v577 = vsel %vm481, %v569, 0
        %579 = vmatpush.msra.mxu0 0.0
        %580 = vmatpush.msra.mxu0 0.0
        %581 = vmatpush.msra.mxu0 0.0
        %582 = vmatpush.msra.mxu0 0.0
        %583 = vmatpush.msra.mxu0 0.0
        %584 = vmatpush.msra.mxu0 0.0
        %585 = vmatpush.msra.mxu0 0.0
        %586 = vmatpush.msra.mxu0 0.0
        %587 = vmatpush.msra.mxu0 0.0
        %588 = vmatpush.msra.mxu0 0.0
        %589 = vmatpush.msra.mxu0 0.0
        %590 = vmatpush.msra.mxu0 0.0
        %591 = vmatpush.msra.mxu0 0.0
        %592 = vmatpush.msra.mxu0 0.0
        %593 = vmatpush.msra.mxu0 %v573
        %594 = vmatpush.msra.mxu0 %v571
        %595 = vmatmul.f32.gmra.mxu0 %v577
        %v596 = vpop.f32.mrf.mxu0
        %v597 = vadd.f32 0.0, %v596
        %598 = vdwg.mxu0
        %600 = vrot.lane.b32.xlu0 %v597, 4
        %v601 = vpop.permute.xlu0 %600
        %vm603 = vcmask 64544
        %604 = vst.msk [vmem:[#allocation3] sm:$0xff] %vm603, %v601
        %v605 = vld [vmem:[#allocation2] sm:$0xff]
        %v606 = vld [vmem:[#allocation2 + $0x8] sm:$0xff]
        %607 = vrot.lane.b32.xlu0 %v447, 120
        %v608 = vpop.permute.xlu0 %607
        %611 = vrot.lane.b32.xlu0 %v605, 120
        %v612 = vpop.permute.xlu0 %611
        %613 = vrot.lane.b32.xlu0 %v606, 120
        %v614 = vpop.permute.xlu0 %613
        %v615 = vsel %vm451, %v608, 0
        %v617 = vsel %vm451, %v612, 0
        %v619 = vsel %vm451, %v614, 0
        %621 = vmatpush.xpose.msra.mxu0 0.0
        %622 = vmatpush.xpose.msra.mxu0 0.0
        %623 = vmatpush.xpose.msra.mxu0 0.0
        %624 = vmatpush.xpose.msra.mxu0 0.0
        %625 = vmatpush.xpose.msra.mxu0 0.0
        %626 = vmatpush.xpose.msra.mxu0 0.0
        %627 = vmatpush.xpose.msra.mxu0 0.0
        %628 = vmatpush.xpose.msra.mxu0 0.0
        %629 = vmatpush.xpose.msra.mxu0 0.0
        %630 = vmatpush.xpose.msra.mxu0 0.0
        %631 = vmatpush.xpose.msra.mxu0 0.0
        %632 = vmatpush.xpose.msra.mxu0 0.0
        %633 = vmatpush.xpose.msra.mxu0 0.0
        %634 = vmatpush.xpose.msra.mxu0 0.0
        %635 = vmatpush.xpose.msra.mxu0 %v619
        %636 = vmatpush.xpose.msra.mxu0 %v617
        %637 = vmatmul.f32.gmra.mxu0 %v615
        %v638 = vpop.f32.mrf.mxu0
        %v639 = vadd.f32 0.0, %v638
        %640 = vdwg.mxu0
        %v641 = vsel %vm481, %v639, -inf
        %642 = vmax.xlane.f32.xlu0 %v641
        %v643 = vpop.xlane.xlu0 %642
        %v644 = vsub.f32 %v639, %v643
        %v645 = vmul.f32 %v644, 1.442695
        %v646 = vpow.pop %v645
        %v647 = vsel %vm481, %v646, 0.0
        %648 = vadd.xlane.f32.xlu0 %v647
        %v649 = vpop.xlane.xlu0 %648
        %v650 = vrcp.pop %v649
        %v651 = vmul.f32 %v646, %v650
        %652 = vrot.lane.b32.xlu0 %v605, 88
        %v653 = vpop.permute.xlu0 %652
        %654 = vrot.lane.b32.xlu0 %v606, 88
        %v655 = vpop.permute.xlu0 %654
        %v659 = vsel %vm481, %v651, 0
        %661 = vmatpush.msra.mxu0 0.0
        %662 = vmatpush.msra.mxu0 0.0
        %663 = vmatpush.msra.mxu0 0.0
        %664 = vmatpush.msra.mxu0 0.0
        %665 = vmatpush.msra.mxu0 0.0
        %666 = vmatpush.msra.mxu0 0.0
        %667 = vmatpush.msra.mxu0 0.0
        %668 = vmatpush.msra.mxu0 0.0
        %669 = vmatpush.msra.mxu0 0.0
        %670 = vmatpush.msra.mxu0 0.0
        %671 = vmatpush.msra.mxu0 0.0
        %672 = vmatpush.msra.mxu0 0.0
        %673 = vmatpush.msra.mxu0 0.0
        %674 = vmatpush.msra.mxu0 0.0
        %675 = vmatpush.msra.mxu0 %v655
        %676 = vmatpush.msra.mxu0 %v653
        %677 = vmatmul.f32.gmra.mxu0 %v659
        %v678 = vpop.f32.mrf.mxu0
        %v679 = vadd.f32 0.0, %v678
        %680 = vdwg.mxu0
        %682 = vrot.lane.b32.xlu0 %v679, 8
        %v683 = vpop.permute.xlu0 %682
        %vm685 = vcmask 97344
        %686 = vst.msk [vmem:[#allocation3] sm:$0xff] %vm685, %v683
        %v687 = vld [vmem:[#allocation2] sm:$0xff]
        %v688 = vld [vmem:[#allocation2 + $0x8] sm:$0xff]
        %689 = vrot.lane.b32.xlu0 %v447, 116
        %v690 = vpop.permute.xlu0 %689
        %693 = vrot.lane.b32.xlu0 %v687, 116
        %v694 = vpop.permute.xlu0 %693
        %695 = vrot.lane.b32.xlu0 %v688, 116
        %v696 = vpop.permute.xlu0 %695
        %v697 = vsel %vm451, %v690, 0
        %v699 = vsel %vm451, %v694, 0
        %v701 = vsel %vm451, %v696, 0
        %703 = vmatpush.xpose.msra.mxu0 0.0
        %704 = vmatpush.xpose.msra.mxu0 0.0
        %705 = vmatpush.xpose.msra.mxu0 0.0
        %706 = vmatpush.xpose.msra.mxu0 0.0
        %707 = vmatpush.xpose.msra.mxu0 0.0
        %708 = vmatpush.xpose.msra.mxu0 0.0
        %709 = vmatpush.xpose.msra.mxu0 0.0
        %710 = vmatpush.xpose.msra.mxu0 0.0
        %711 = vmatpush.xpose.msra.mxu0 0.0
        %712 = vmatpush.xpose.msra.mxu0 0.0
        %713 = vmatpush.xpose.msra.mxu0 0.0
        %714 = vmatpush.xpose.msra.mxu0 0.0
        %715 = vmatpush.xpose.msra.mxu0 0.0
        %716 = vmatpush.xpose.msra.mxu0 0.0
        %717 = vmatpush.xpose.msra.mxu0 %v701
        %718 = vmatpush.xpose.msra.mxu0 %v699
        %719 = vmatmul.f32.gmra.mxu0 %v697
        %v720 = vpop.f32.mrf.mxu0
        %v721 = vadd.f32 0.0, %v720
        %722 = vdwg.mxu0
        %v723 = vsel %vm481, %v721, -inf
        %724 = vmax.xlane.f32.xlu0 %v723
        %v725 = vpop.xlane.xlu0 %724
        %v726 = vsub.f32 %v721, %v725
        %v727 = vmul.f32 %v726, 1.442695
        %v728 = vpow.pop %v727
        %v729 = vsel %vm481, %v728, 0.0
        %730 = vadd.xlane.f32.xlu0 %v729
        %v731 = vpop.xlane.xlu0 %730
        %v732 = vrcp.pop %v731
        %v733 = vmul.f32 %v728, %v732
        %734 = vrot.lane.b32.xlu0 %v687, 84
        %v735 = vpop.permute.xlu0 %734
        %736 = vrot.lane.b32.xlu0 %v688, 84
        %v737 = vpop.permute.xlu0 %736
        %v741 = vsel %vm481, %v733, 0
        %743 = vmatpush.msra.mxu0 0.0
        %744 = vmatpush.msra.mxu0 0.0
        %745 = vmatpush.msra.mxu0 0.0
        %746 = vmatpush.msra.mxu0 0.0
        %747 = vmatpush.msra.mxu0 0.0
        %748 = vmatpush.msra.mxu0 0.0
        %749 = vmatpush.msra.mxu0 0.0
        %750 = vmatpush.msra.mxu0 0.0
        %751 = vmatpush.msra.mxu0 0.0
        %752 = vmatpush.msra.mxu0 0.0
        %753 = vmatpush.msra.mxu0 0.0
        %754 = vmatpush.msra.mxu0 0.0
        %755 = vmatpush.msra.mxu0 0.0
        %756 = vmatpush.msra.mxu0 0.0
        %757 = vmatpush.msra.mxu0 %v737
        %758 = vmatpush.msra.mxu0 %v735
        %759 = vmatmul.f32.gmra.mxu0 %v741
        %v760 = vpop.f32.mrf.mxu0
        %v761 = vadd.f32 0.0, %v760
        %762 = vdwg.mxu0
        %764 = vrot.lane.b32.xlu0 %v761, 12
        %v765 = vpop.permute.xlu0 %764
        %vm767 = vcmask 130144
        %768 = vst.msk [vmem:[#allocation3] sm:$0xff] %vm767, %v765
        %v769 = vld [vmem:[#allocation2] sm:$0xff]
        %v770 = vld [vmem:[#allocation2 + $0x8] sm:$0xff]
        %771 = vrot.lane.b32.xlu0 %v447, 112
        %v772 = vpop.permute.xlu0 %771
        %775 = vrot.lane.b32.xlu0 %v769, 112
        %v776 = vpop.permute.xlu0 %775
        %777 = vrot.lane.b32.xlu0 %v770, 112
        %v778 = vpop.permute.xlu0 %777
        %v779 = vsel %vm451, %v772, 0
        %v781 = vsel %vm451, %v776, 0
        %v783 = vsel %vm451, %v778, 0
        %785 = vmatpush.xpose.msra.mxu0 0.0
        %786 = vmatpush.xpose.msra.mxu0 0.0
        %787 = vmatpush.xpose.msra.mxu0 0.0
        %788 = vmatpush.xpose.msra.mxu0 0.0
        %789 = vmatpush.xpose.msra.mxu0 0.0
        %790 = vmatpush.xpose.msra.mxu0 0.0
        %791 = vmatpush.xpose.msra.mxu0 0.0
        %792 = vmatpush.xpose.msra.mxu0 0.0
        %793 = vmatpush.xpose.msra.mxu0 0.0
        %794 = vmatpush.xpose.msra.mxu0 0.0
        %795 = vmatpush.xpose.msra.mxu0 0.0
        %796 = vmatpush.xpose.msra.mxu0 0.0
        %797 = vmatpush.xpose.msra.mxu0 0.0
        %798 = vmatpush.xpose.msra.mxu0 0.0
        %799 = vmatpush.xpose.msra.mxu0 %v783
        %800 = vmatpush.xpose.msra.mxu0 %v781
        %801 = vmatmul.f32.gmra.mxu0 %v779
        %v802 = vpop.f32.mrf.mxu0
        %v803 = vadd.f32 0.0, %v802
        %804 = vdwg.mxu0
        %v805 = vsel %vm481, %v803, -inf
        %806 = vmax.xlane.f32.xlu0 %v805
        %v807 = vpop.xlane.xlu0 %806
        %v808 = vsub.f32 %v803, %v807
        %v809 = vmul.f32 %v808, 1.442695
        %v810 = vpow.pop %v809
        %v811 = vsel %vm481, %v810, 0.0
        %812 = vadd.xlane.f32.xlu0 %v811
        %v813 = vpop.xlane.xlu0 %812
        %v814 = vrcp.pop %v813
        %v815 = vmul.f32 %v810, %v814
        %816 = vrot.lane.b32.xlu0 %v769, 80
        %v817 = vpop.permute.xlu0 %816
        %818 = vrot.lane.b32.xlu0 %v770, 80
        %v819 = vpop.permute.xlu0 %818
        %v823 = vsel %vm481, %v815, 0
        %825 = vmatpush.msra.mxu0 0.0
        %826 = vmatpush.msra.mxu0 0.0
        %827 = vmatpush.msra.mxu0 0.0
        %828 = vmatpush.msra.mxu0 0.0
        %829 = vmatpush.msra.mxu0 0.0
        %830 = vmatpush.msra.mxu0 0.0
        %831 = vmatpush.msra.mxu0 0.0
        %832 = vmatpush.msra.mxu0 0.0
        %833 = vmatpush.msra.mxu0 0.0
        %834 = vmatpush.msra.mxu0 0.0
        %835 = vmatpush.msra.mxu0 0.0
        %836 = vmatpush.msra.mxu0 0.0
        %837 = vmatpush.msra.mxu0 0.0
        %838 = vmatpush.msra.mxu0 0.0
        %839 = vmatpush.msra.mxu0 %v819
        %840 = vmatpush.msra.mxu0 %v817
        %841 = vmatmul.f32.gmra.mxu0 %v823
        %v842 = vpop.f32.mrf.mxu0
        %v843 = vadd.f32 0.0, %v842
        %844 = vdwg.mxu0
        %846 = vrot.lane.b32.xlu0 %v843, 16
        %v847 = vpop.permute.xlu0 %846
        %vm849 = vcmask 162944
        %850 = vst.msk [vmem:[#allocation3] sm:$0xff] %vm849, %v847
        %v851 = vld [vmem:[#allocation2] sm:$0xff]
        %v852 = vld [vmem:[#allocation2 + $0x8] sm:$0xff]
        %853 = vrot.lane.b32.xlu0 %v447, 108
        %v854 = vpop.permute.xlu0 %853
        %857 = vrot.lane.b32.xlu0 %v851, 108
        %v858 = vpop.permute.xlu0 %857
        %859 = vrot.lane.b32.xlu0 %v852, 108
        %v860 = vpop.permute.xlu0 %859
        %v861 = vsel %vm451, %v854, 0
        %v863 = vsel %vm451, %v858, 0
        %v865 = vsel %vm451, %v860, 0
        %867 = vmatpush.xpose.msra.mxu0 0.0
        %868 = vmatpush.xpose.msra.mxu0 0.0
        %869 = vmatpush.xpose.msra.mxu0 0.0
        %870 = vmatpush.xpose.msra.mxu0 0.0
        %871 = vmatpush.xpose.msra.mxu0 0.0
        %872 = vmatpush.xpose.msra.mxu0 0.0
        %873 = vmatpush.xpose.msra.mxu0 0.0
        %874 = vmatpush.xpose.msra.mxu0 0.0
        %875 = vmatpush.xpose.msra.mxu0 0.0
        %876 = vmatpush.xpose.msra.mxu0 0.0
        %877 = vmatpush.xpose.msra.mxu0 0.0
        %878 = vmatpush.xpose.msra.mxu0 0.0
        %879 = vmatpush.xpose.msra.mxu0 0.0
        %880 = vmatpush.xpose.msra.mxu0 0.0
        %881 = vmatpush.xpose.msra.mxu0 %v865
        %882 = vmatpush.xpose.msra.mxu0 %v863
        %883 = vmatmul.f32.gmra.mxu0 %v861
        %v884 = vpop.f32.mrf.mxu0
        %v885 = vadd.f32 0.0, %v884
        %886 = vdwg.mxu0
        %v887 = vsel %vm481, %v885, -inf
        %888 = vmax.xlane.f32.xlu0 %v887
        %v889 = vpop.xlane.xlu0 %888
        %v890 = vsub.f32 %v885, %v889
        %v891 = vmul.f32 %v890, 1.442695
        %v892 = vpow.pop %v891
        %v893 = vsel %vm481, %v892, 0.0
        %894 = vadd.xlane.f32.xlu0 %v893
        %v895 = vpop.xlane.xlu0 %894
        %v896 = vrcp.pop %v895
        %v897 = vmul.f32 %v892, %v896
        %898 = vrot.lane.b32.xlu0 %v851, 76
        %v899 = vpop.permute.xlu0 %898
        %900 = vrot.lane.b32.xlu0 %v852, 76
        %v901 = vpop.permute.xlu0 %900
        %v905 = vsel %vm481, %v897, 0
        %907 = vmatpush.msra.mxu0 0.0
        %908 = vmatpush.msra.mxu0 0.0
        %909 = vmatpush.msra.mxu0 0.0
        %910 = vmatpush.msra.mxu0 0.0
        %911 = vmatpush.msra.mxu0 0.0
        %912 = vmatpush.msra.mxu0 0.0
        %913 = vmatpush.msra.mxu0 0.0
        %914 = vmatpush.msra.mxu0 0.0
        %915 = vmatpush.msra.mxu0 0.0
        %916 = vmatpush.msra.mxu0 0.0
        %917 = vmatpush.msra.mxu0 0.0
        %918 = vmatpush.msra.mxu0 0.0
        %919 = vmatpush.msra.mxu0 0.0
        %920 = vmatpush.msra.mxu0 0.0
        %921 = vmatpush.msra.mxu0 %v901
        %922 = vmatpush.msra.mxu0 %v899
        %923 = vmatmul.f32.gmra.mxu0 %v905
        %v924 = vpop.f32.mrf.mxu0
        %v925 = vadd.f32 0.0, %v924
        %926 = vdwg.mxu0
        %928 = vrot.lane.b32.xlu0 %v925, 20
        %v929 = vpop.permute.xlu0 %928
        %vm931 = vcmask 195744
        %932 = vst.msk [vmem:[#allocation3] sm:$0xff] %vm931, %v929
        %v933 = vld [vmem:[#allocation2] sm:$0xff]
        %v934 = vld [vmem:[#allocation2 + $0x8] sm:$0xff]
        %935 = vrot.lane.b32.xlu0 %v447, 104
        %v936 = vpop.permute.xlu0 %935
        %939 = vrot.lane.b32.xlu0 %v933, 104
        %v940 = vpop.permute.xlu0 %939
        %941 = vrot.lane.b32.xlu0 %v934, 104
        %v942 = vpop.permute.xlu0 %941
        %v943 = vsel %vm451, %v936, 0
        %v945 = vsel %vm451, %v940, 0
        %v947 = vsel %vm451, %v942, 0
        %949 = vmatpush.xpose.msra.mxu0 0.0
        %950 = vmatpush.xpose.msra.mxu0 0.0
        %951 = vmatpush.xpose.msra.mxu0 0.0
        %952 = vmatpush.xpose.msra.mxu0 0.0
        %953 = vmatpush.xpose.msra.mxu0 0.0
        %954 = vmatpush.xpose.msra.mxu0 0.0
        %955 = vmatpush.xpose.msra.mxu0 0.0
        %956 = vmatpush.xpose.msra.mxu0 0.0
        %957 = vmatpush.xpose.msra.mxu0 0.0
        %958 = vmatpush.xpose.msra.mxu0 0.0
        %959 = vmatpush.xpose.msra.mxu0 0.0
        %960 = vmatpush.xpose.msra.mxu0 0.0
        %961 = vmatpush.xpose.msra.mxu0 0.0
        %962 = vmatpush.xpose.msra.mxu0 0.0
        %963 = vmatpush.xpose.msra.mxu0 %v947
        %964 = vmatpush.xpose.msra.mxu0 %v945
        %965 = vmatmul.f32.gmra.mxu0 %v943
        %v966 = vpop.f32.mrf.mxu0
        %v967 = vadd.f32 0.0, %v966
        %968 = vdwg.mxu0
        %v969 = vsel %vm481, %v967, -inf
        %970 = vmax.xlane.f32.xlu0 %v969
        %v971 = vpop.xlane.xlu0 %970
        %v972 = vsub.f32 %v967, %v971
        %v973 = vmul.f32 %v972, 1.442695
        %v974 = vpow.pop %v973
        %v975 = vsel %vm481, %v974, 0.0
        %976 = vadd.xlane.f32.xlu0 %v975
        %v977 = vpop.xlane.xlu0 %976
        %v978 = vrcp.pop %v977
        %v979 = vmul.f32 %v974, %v978
        %980 = vrot.lane.b32.xlu0 %v933, 72
        %v981 = vpop.permute.xlu0 %980
        %982 = vrot.lane.b32.xlu0 %v934, 72
        %v983 = vpop.permute.xlu0 %982
        %v987 = vsel %vm481, %v979, 0
        %989 = vmatpush.msra.mxu0 0.0
        %990 = vmatpush.msra.mxu0 0.0
        %991 = vmatpush.msra.mxu0 0.0
        %992 = vmatpush.msra.mxu0 0.0
        %993 = vmatpush.msra.mxu0 0.0
        %994 = vmatpush.msra.mxu0 0.0
        %995 = vmatpush.msra.mxu0 0.0
        %996 = vmatpush.msra.mxu0 0.0
        %997 = vmatpush.msra.mxu0 0.0
        %998 = vmatpush.msra.mxu0 0.0
        %999 = vmatpush.msra.mxu0 0.0
        %1000 = vmatpush.msra.mxu0 0.0
        %1001 = vmatpush.msra.mxu0 0.0
        %1002 = vmatpush.msra.mxu0 0.0
        %1003 = vmatpush.msra.mxu0 %v983
        %1004 = vmatpush.msra.mxu0 %v981
        %1005 = vmatmul.f32.gmra.mxu0 %v987
        %v1006 = vpop.f32.mrf.mxu0
        %v1007 = vadd.f32 0.0, %v1006
        %1008 = vdwg.mxu0
        %1010 = vrot.lane.b32.xlu0 %v1007, 24
        %v1011 = vpop.permute.xlu0 %1010
        %vm1013 = vcmask 228544
        %1014 = vst.msk [vmem:[#allocation3] sm:$0xff] %vm1013, %v1011
        %v1015 = vld [vmem:[#allocation2] sm:$0xff]
        %v1016 = vld [vmem:[#allocation2 + $0x8] sm:$0xff]
        %1017 = vrot.lane.b32.xlu0 %v447, 100
        %v1018 = vpop.permute.xlu0 %1017
        %1021 = vrot.lane.b32.xlu0 %v1015, 100
        %v1022 = vpop.permute.xlu0 %1021
        %1023 = vrot.lane.b32.xlu0 %v1016, 100
        %v1024 = vpop.permute.xlu0 %1023
        %v1025 = vsel %vm451, %v1018, 0
        %v1027 = vsel %vm451, %v1022, 0
        %v1029 = vsel %vm451, %v1024, 0
        %1031 = vmatpush.xpose.msra.mxu0 0.0
        %1032 = vmatpush.xpose.msra.mxu0 0.0
        %1033 = vmatpush.xpose.msra.mxu0 0.0
        %1034 = vmatpush.xpose.msra.mxu0 0.0
        %1035 = vmatpush.xpose.msra.mxu0 0.0
        %1036 = vmatpush.xpose.msra.mxu0 0.0
        %1037 = vmatpush.xpose.msra.mxu0 0.0
        %1038 = vmatpush.xpose.msra.mxu0 0.0
        %1039 = vmatpush.xpose.msra.mxu0 0.0
        %1040 = vmatpush.xpose.msra.mxu0 0.0
        %1041 = vmatpush.xpose.msra.mxu0 0.0
        %1042 = vmatpush.xpose.msra.mxu0 0.0
        %1043 = vmatpush.xpose.msra.mxu0 0.0
        %1044 = vmatpush.xpose.msra.mxu0 0.0
        %1045 = vmatpush.xpose.msra.mxu0 %v1029
        %1046 = vmatpush.xpose.msra.mxu0 %v1027
        %1047 = vmatmul.f32.gmra.mxu0 %v1025
        %v1048 = vpop.f32.mrf.mxu0
        %v1049 = vadd.f32 0.0, %v1048
        %1050 = vdwg.mxu0
        %v1051 = vsel %vm481, %v1049, -inf
        %1052 = vmax.xlane.f32.xlu0 %v1051
        %v1053 = vpop.xlane.xlu0 %1052
        %v1054 = vsub.f32 %v1049, %v1053
        %v1055 = vmul.f32 %v1054, 1.442695
        %v1056 = vpow.pop %v1055
        %v1057 = vsel %vm481, %v1056, 0.0
        %1058 = vadd.xlane.f32.xlu0 %v1057
        %v1059 = vpop.xlane.xlu0 %1058
        %v1060 = vrcp.pop %v1059
        %v1061 = vmul.f32 %v1056, %v1060
        %1062 = vrot.lane.b32.xlu0 %v1015, 68
        %v1063 = vpop.permute.xlu0 %1062
        %1064 = vrot.lane.b32.xlu0 %v1016, 68
        %v1065 = vpop.permute.xlu0 %1064
        %v1069 = vsel %vm481, %v1061, 0
        %1071 = vmatpush.msra.mxu0 0.0
        %1072 = vmatpush.msra.mxu0 0.0
        %1073 = vmatpush.msra.mxu0 0.0
        %1074 = vmatpush.msra.mxu0 0.0
        %1075 = vmatpush.msra.mxu0 0.0
        %1076 = vmatpush.msra.mxu0 0.0
        %1077 = vmatpush.msra.mxu0 0.0
        %1078 = vmatpush.msra.mxu0 0.0
        %1079 = vmatpush.msra.mxu0 0.0
        %1080 = vmatpush.msra.mxu0 0.0
        %1081 = vmatpush.msra.mxu0 0.0
        %1082 = vmatpush.msra.mxu0 0.0
        %1083 = vmatpush.msra.mxu0 0.0
        %1084 = vmatpush.msra.mxu0 0.0
        %1085 = vmatpush.msra.mxu0 %v1065
        %1086 = vmatpush.msra.mxu0 %v1063
        %1087 = vmatmul.f32.gmra.mxu0 %v1069
        %v1088 = vpop.f32.mrf.mxu0
        %v1089 = vadd.f32 0.0, %v1088
        %1090 = vdwg.mxu0
        %1092 = vrot.lane.b32.xlu0 %v1089, 28
        %v1093 = vpop.permute.xlu0 %1092
        %vm1095 = vcmask 261344
        %1096 = vst.msk [vmem:[#allocation3] sm:$0xff] %vm1095, %v1093
        %v1097 = vld [vmem:[#allocation3] sm:$0xff]
        %v1098 = vld [vmem:[#allocation12] sm:$0xff]
        %v1099 = vld [vmem:[#allocation12 + $0x8] sm:$0xff]
        %v1100 = vld [vmem:[#allocation12 + $0x10] sm:$0xff]
        %v1101 = vld [vmem:[#allocation12 + $0x18] sm:$0xff]
        %v1102 = vld [vmem:[%s5] sm:$0x1]
        %v1104 = vperm.slane %v1102, 0
        %v1107 = vsel %vm425, %v1097, 0
        %1109 = vmatpush.msra.mxu0 0.0
        %1110 = vmatpush.msra.mxu0 0.0
        %1111 = vmatpush.msra.mxu0 0.0
        %1112 = vmatpush.msra.mxu0 0.0
        %1113 = vmatpush.msra.mxu0 0.0
        %1114 = vmatpush.msra.mxu0 0.0
        %1115 = vmatpush.msra.mxu0 0.0
        %1116 = vmatpush.msra.mxu0 0.0
        %1117 = vmatpush.msra.mxu0 0.0
        %1118 = vmatpush.msra.mxu0 0.0
        %1119 = vmatpush.msra.mxu0 0.0
        %1120 = vmatpush.msra.mxu0 0.0
        %1121 = vmatpush.msra.mxu0 %v1101
        %1122 = vmatpush.msra.mxu0 %v1100
        %1123 = vmatpush.msra.mxu0 %v1099
        %1124 = vmatpush.msra.mxu0 %v1098
        %1125 = vmatmul.f32.gmra.mxu0 %v1107
        %v1126 = vpop.f32.mrf.mxu0
        %v1127 = vadd.f32 %v1104, %v1126
        %1128 = vdwg.mxu0
        %1129 = vst.msk [vmem:[%s376] sm:$0xff] %vm425, %v1127
        %s1130 = sand.u32 %s187, 1
        %s1131 = scalar_lea.sflag [#allocation6], %s1130
        %s1132 = sand.u32 %s187, 1
        %s1133 = smul.addr %s1132, 8
        %s1134 = scalar_lea.vmem [#allocation13], %s1133
        // Predicated region
        $region69: #{tpu_custom_call.1} parent=43 // pred_check
          %p1135 = pneg %p197
        $region70: #{tpu_custom_call.1} parent=43 // pred_check_branch
          %1137 = sbr.rel (%p1135) target = $region72
        $region71: #{tpu_custom_call.1} parent=43 // pred_region
          %1139 = vsyncadd %s1131, 0
          %s1140 = sadd.s32 %s32, %s31
          %s1141 = smul.addr %s1140, 8
          %s1142 = scalar_lea.hbm %s6, %s1141
          %s1144 = sshll.u32 %s1134, 4
          %s1145 = int_to_ptr.vmem [resolvable:$true] %s1144
          %s1146 = sshll.u32 %s1142, 4
          %s1147 = int_to_ptr.hbm [resolvable:$true] %s1146
          %1149 = dma.vmem_to_hbm [thread:$0]  %s1145, 128, %s1147, %s1131
        $region72: #{tpu_custom_call.1} parent=43 // pred_fallthru
          _
      $region44: #{tpu_custom_call.1} parent=5 // pred_fallthru
        _
      %p1150 = scmp.le.s32.totalorder 2, %s22
      // Predicated region
      $region73: #{tpu_custom_call.1} parent=5 // pred_check
        %p1151 = pneg %p1150
      $region74: #{tpu_custom_call.1} parent=5 // pred_check_branch
        %1153 = sbr.rel (%p1151) target = $region76
      $region75: #{tpu_custom_call.1} parent=5 // pred_region
        %s1154 = ssub.s32 %s22, 2
        // Predicated region
        $region77: #{tpu_custom_call.1} parent=75 // pred_check
          %p1155 = pneg %p203
        $region78: #{tpu_custom_call.1} parent=75 // pred_check_branch
          %1157 = sbr.rel (%p1155) target = $region80
        $region79: #{tpu_custom_call.1} parent=75 // pred_region
          %s1158 = sand.u32 %s188, 1
          %s1159 = scalar_lea.sflag [#allocation6], %s1158
          %s1160 = sand.u32 %s188, 1
          %s1161 = smul.addr %s1160, 8
          %s1162 = scalar_lea.vmem [#allocation13], %s1161
          %1164 = dma.done %s1159, 128
        $region80: #{tpu_custom_call.1} parent=75 // pred_fallthru
          _
      $region76: #{tpu_custom_call.1} parent=5 // pred_fallthru
        _
    $region6: #{tpu_custom_call.1} parent=1 // loop_footer
      %s26 = sadd.s32 1, %s22
    $region7: #{tpu_custom_call.1} parent=1 // loop_footer_branch
      %21 = sbr.rel target = $region3
    $region8: #{tpu_custom_call.1} parent=1 // loop_exit
      _
    %1165 = vsyncpa [#allocation5], 1
    %s1166 = scalar_lea.sflag [#allocation5], 1
    %1167 = vsyncpa %s1166, 1
    %1168 = vsyncpa [#allocation8], 1
    %s1169 = scalar_lea.sflag [#allocation8], 1
    %1170 = vsyncpa %s1169, 1
    %1171 = vsyncpa [#allocation11], 1
    %1172 = vsyncpa [#allocation6], 1
    %s1173 = scalar_lea.sflag [#allocation6], 1
    %1174 = vsyncpa %s1173, 1

</llo_original>
